<compile_context>
chip_gen: v5e
topology: v5e:2x2
jax: 0.10.0
libtpu: 0.0.40
codegen_flags: <defaults>
</compile_context>

<pallas_src>
import jax
import jax.numpy as jnp
from jax.experimental import pallas as pl
from jax.experimental.pallas import tpu as pltpu


# ---------------------------------------------------------------------------
# Helpers shared by the Pallas wrapper and the pure-JAX reference
# ---------------------------------------------------------------------------

def _lane_pad_channels(C, W, lane=128):
    """Smallest Cp >= C with (W * Cp) % 128 == 0 (lane-dense last dim)."""
    for Cp in range(C, C + lane + 1):
        if (W * Cp) % lane == 0:
            return Cp
    return C   # fall back (still correct, just masked stores)


def _prep_conv(act, w_hwio, scale, bias):
    """Wrapper-side layout plumbing (pure XLA, tiny arrays):
       - pad channels to a lane-dense width,
       - spatial zero-pad and flatten (W, C) onto lanes,
       - pre-shift/stack the 3 dy row windows along K and fold dx into a block-banded
         weight matrix, so the conv becomes ONE bf16 MXU matmul per image."""
    B, T, H, W, Cin = act.shape
    Cout = w_hwio.shape[-1]
    Cin_p = _lane_pad_channels(Cin, W)
    Cout_p = _lane_pad_channels(Cout, W)
    Wp = W + 2
    Kp = Wp * Cin_p
    N = W * Cout_p

    act_p = jnp.pad(act, ((0, 0), (0, 0), (0, 0), (0, 0), (0, Cin_p - Cin)))
    w_p = jnp.pad(w_hwio.astype(jnp.float32),
                  ((0, 0), (0, 0), (0, Cin_p - Cin), (0, Cout_p - Cout)))
    scale_p = jnp.pad(scale.astype(jnp.float32), (0, Cout_p - Cout))
    bias_p = jnp.pad(bias.astype(jnp.float32), (0, Cout_p - Cout))

    # Spatial zero-pad, flatten (W+2, Cin_p) onto lanes.
    xp = jnp.pad(act_p, ((0, 0), (0, 0), (1, 1), (1, 1), (0, 0))).reshape(B, T, H + 2, Kp)
    # Pre-shifted dy row windows concatenated along K (3.4x of a ~30 KiB slab, bf16):
    # kernel sees plain 2D rows, zero in-kernel relayouts.
    x_cat = jnp.concatenate(
        [xp[:, :, dy:dy + H, :].reshape(B, T * H, Kp) for dy in range(3)],
        axis=-1).astype(jnp.bfloat16)                              # (B, T*H, 3*Kp)

    # Block-banded weights with the dx offsets baked in; dy folded via the K concat.
    eye = jnp.eye(Wp, dtype=jnp.float32)
    mats = []
    for dy in range(3):
        m = jnp.zeros((Wp, Cin_p, W, Cout_p), jnp.float32)
        for dx in range(3):
            sel = eye[:, dx:dx + W]                                # sel[w+dx, w] = 1
            m = m + sel[:, None, :, None] * w_p[dy, dx][None, :, None, :]
        mats.append(m.reshape(Kp, N))
    w_cat = jnp.concatenate(mats, axis=0).astype(jnp.bfloat16)     # (3*Kp, N)

    scale_row = jnp.tile(scale_p, W).reshape(1, N)
    bias_row = jnp.tile(bias_p, W).reshape(1, N)
    dims = dict(B=B, T=T, H=H, W=W, Cout=Cout, Cout_p=Cout_p, K3=3 * Kp, N=N)
    return x_cat, w_cat, scale_row, bias_row, dims


def _default_batch_block(B):
    """Grid strategy: single-TC chips (v5e/v6e) fold the whole batch into one grid step
    (per-step overhead dominates a kernel this small); v7x (2 TCs) keeps grid=(B,) parallel."""
    try:
        kind = jax.devices()[0].device_kind.lower()
    except Exception:
        return 1
    single_tc = any(tag in kind for tag in ("v5 lite", "v5e", "v5litepod", "v6 lite", "v6e"))
    return B if single_tc else 1


# ---------------------------------------------------------------------------
# Fused Pallas kernel: 1 MXU matmul (conv3x3 + folded BN, all T) + IF recurrence
# ---------------------------------------------------------------------------

def _make_fused_kernel(Bb, T, H, N, with_residual):
    def kernel(*refs):
        if with_residual:
            th_ref, x_ref, w_ref, scale_ref, bias_ref, res_ref, o_ref = refs
        else:
            th_ref, x_ref, w_ref, scale_ref, bias_ref, o_ref = refs
            res_ref = None

        th = th_ref[0]
        w = w_ref[...]                # (K3, N) bf16
        scale_row = scale_ref[...]    # (1, N) f32
        bias_row = bias_ref[...]      # (1, N) f32

        for b in range(Bb):           # static; Bb = 1 (multi-TC) or B (single-TC collapse)
            # conv3x3 + folded BN for ALL T timesteps: one bf16 MXU matmul, f32 accumulate.
            acc = jnp.dot(x_ref[b], w, preferred_element_type=jnp.float32)   # (T*H, N)
            y = acc * scale_row + bias_row

            # IF integrate / fire / inhibit recurrence (same math as the reference module).
            membrane = jnp.zeros((H, N), jnp.float32) + 0.5 * th
            sum_spikes = jnp.zeros((H, N), jnp.float32)
            for dt in range(T):                       # T small & static -> unrolled
                y_t = y[dt * H:(dt + 1) * H, :]       # static, tile-aligned sublane slice
                if res_ref is not None:
                    y_t = y_t + res_ref[b, dt]        # identity branch (Twoways)
                membrane = membrane + y_t
                spikes = membrane >= th
                membrane = jnp.where(spikes, membrane - th, membrane)
                spikes_f = spikes.astype(jnp.float32)
                sum_spikes = sum_spikes + spikes_f
                inhibit = jnp.logical_and(membrane <= -0.001, sum_spikes > 0.0)
                membrane = jnp.where(inhibit, membrane + th, membrane)
                inhibit_f = inhibit.astype(jnp.float32)
                sum_spikes = sum_spikes - inhibit_f
                o_ref[b, dt] = (spikes_f - inhibit_f) * th      # spike_train * threshold

    return kernel


# ---------------------------------------------------------------------------
# Fused wrapper: one pallas_call per Spiking_Oneway / Spiking_Twoways part
# ---------------------------------------------------------------------------

def spiking_conv_bn_if(act, w_hwio, scale, bias, alpha, residual=None, batch_block=None):
    """conv3x3(stride=1) -> folded BN -> IF spiking loop, fused in a single kernel.

    act:      (B, T, H, W, Cin) float32
    residual: None (Oneway) or (B, T, H, W, Cout) float32 identity branch (Twoways)
    returns   (B, T, H, W, Cout) float32 spike train * threshold
    """
    x_cat, w_cat, scale_row, bias_row, d = _prep_conv(act, w_hwio, scale, bias)
    B, T, H, W = d['B'], d['T'], d['H'], d['W']
    K3, N, Cout, Cout_p = d['K3'], d['N'], d['Cout'], d['Cout_p']

    if batch_block is None:
        batch_block = _default_batch_block(B)
    Bb = max(1, min(int(batch_block), B))
    if B % Bb != 0:
        Bb = 1
    grid = (B // Bb,)

    th = jnp.asarray(alpha, jnp.float32).reshape(1)
    kernel = _make_fused_kernel(Bb, T, H, N, residual is not None)

    in_specs = [
        pl.BlockSpec(memory_space=pltpu.MemorySpace.SMEM),            # IF threshold scalar
        pl.BlockSpec((Bb, T * H, K3), lambda g: (g, 0, 0)),           # pre-shifted bf16 rows
        pl.BlockSpec((K3, N), lambda g: (0, 0)),                      # folded conv weights
        pl.BlockSpec((1, N), lambda g: (0, 0)),                       # folded BN scale
        pl.BlockSpec((1, N), lambda g: (0, 0)),                       # folded BN bias
    ]
    args = [th, x_cat, w_cat, scale_row, bias_row]
    if residual is not None:
        res_p = jnp.pad(residual.astype(jnp.float32),
                        ((0, 0),) * 4 + ((0, Cout_p - Cout),)).reshape(B, T, H, N)
        in_specs.append(pl.BlockSpec((Bb, T, H, N), lambda g: (g, 0, 0, 0)))
        args.append(res_p)

    out = pl.pallas_call(
        kernel,
        out_shape=jax.ShapeDtypeStruct((B, T, H, N), jnp.float32),
        grid=grid,
        in_specs=in_specs,
        out_specs=pl.BlockSpec((Bb, T, H, N), lambda g: (g, 0, 0, 0)),   # lane-dense writeback
        compiler_params=pltpu.CompilerParams(
            dimension_semantics=("parallel",),
            vmem_limit_bytes=32 * 1024 * 1024,        # per-step working set << 1 MiB; safe on v7x
        ),
    )(*args)
    out = out.reshape(B, T, H, W, Cout_p)
    return out[..., :Cout]


# ---------------------------------------------------------------------------
# Parameters & block forward
# ---------------------------------------------------------------------------

def init_params(key, inplanes, planes, eps=1e-5):
    """Deterministic synthetic parameters. BatchNorm is eval-mode and folded to (scale, bias)."""
    ks = jax.random.split(key, 10)

    def bn_fold(kg, kb, km, kv, c):
        gamma = 1.0 + 0.1 * jax.random.normal(kg, (c,), jnp.float32)
        beta = 0.1 * jax.random.normal(kb, (c,), jnp.float32)
        mean = 0.1 * jax.random.normal(km, (c,), jnp.float32)
        var = 0.5 + jax.random.uniform(kv, (c,), jnp.float32)
        s = gamma / jnp.sqrt(var + eps)
        return s, beta - mean * s

    w1 = 0.2 * jax.random.normal(ks[0], (3, 3, inplanes, planes), jnp.float32)  # HWIO
    w2 = 0.2 * jax.random.normal(ks[1], (3, 3, planes, planes), jnp.float32)
    s1, b1 = bn_fold(ks[2], ks[3], ks[4], ks[5], planes)
    s2, b2 = bn_fold(ks[6], ks[7], ks[8], ks[9], planes)
    return dict(w1=w1, s1=s1, b1=b1, w2=w2, s2=s2, b2=b2,
                alpha1=1.0, alpha2=1.0)   # IF.act_alpha is initialized to 1.0


def spiking_basic_block_forward(params, x):
    """x: (B, T, H, W, C) with inplanes == planes, stride=1, downsample=None."""
    # part1: Spiking_Oneway (no residual -> no zeros array materialized)
    out1 = spiking_conv_bn_if(x, params['w1'], params['s1'], params['b1'], params['alpha1'])
    # part2: Spiking_Twoways with residual = identity
    out2 = spiking_conv_bn_if(out1, params['w2'], params['s2'], params['b2'],
                              params['alpha2'], residual=x)
    return out1, out2


# ---------------------------------------------------------------------------
# Pure-JAX references (mirror of the fused kernel math)
# ---------------------------------------------------------------------------

def ref_conv_bn_bf16(act, w_hwio, scale, bias):
    """Same math as the kernel: one bf16 matmul against the folded banded weights, f32 acc."""
    x_cat, w_cat, scale_row, bias_row, d = _prep_conv(act, w_hwio, scale, bias)
    y = jnp.einsum('bmk,kn->bmn', x_cat, w_cat,
                   preferred_element_type=jnp.float32) * scale_row + bias_row
    B, T, H, W, Cout, Cout_p = d['B'], d['T'], d['H'], d['W'], d['Cout'], d['Cout_p']
    return y.reshape(B, T, H, W, Cout_p)[..., :Cout]


def ref_conv_bn_f32(act, w_hwio, scale, bias):
    B, T, H, W, Cin = act.shape
    y = jax.lax.conv_general_dilated(act.reshape(B * T, H, W, Cin), w_hwio, (1, 1), 'SAME',
                                     dimension_numbers=('NHWC', 'HWIO', 'NHWC'))
    return (y * scale + bias).reshape(B, T, H, W, -1)


def ref_if(y, res, th):
    B, T = y.shape[:2]
    membrane = jnp.zeros((B,) + y.shape[2:], jnp.float32) + 0.5 * th
    sum_spikes = jnp.zeros_like(membrane)
    outs = []
    for dt in range(T):
        membrane = membrane + y[:, dt] + res[:, dt]
        spikes = membrane >= th
        membrane = jnp.where(spikes, membrane - th, membrane)
        sf = spikes.astype(jnp.float32)
        sum_spikes = sum_spikes + sf
        inhibit = (membrane <= -0.001) & (sum_spikes > 0)
        membrane = jnp.where(inhibit, membrane + th, membrane)
        inf_ = inhibit.astype(jnp.float32)
        sum_spikes = sum_spikes - inf_
        outs.append((sf - inf_) * th)
    return jnp.stack(outs, axis=1)


def _spike_mismatch(a, b, tol=1e-3):
    return float(jnp.mean((jnp.abs(a - b) > tol).astype(jnp.float32)))


# ---------------------------------------------------------------------------
# main
# ---------------------------------------------------------------------------

if __name__ == "__main__":
    B, C, H, W = 2, 4, 16, 16          # inplanes = planes = 4
    bit = 2
    T = 2 ** bit - 1                    # Spiking_BasicBlock: self.T = 2**bit - 1

    key = jax.random.PRNGKey(0)
    kx, kp = jax.random.split(key)
    x = jax.random.normal(kx, (B, T, H, W, C), jnp.float32)
    params = init_params(kp, inplanes=C, planes=C)

    out1, out2 = jax.jit(spiking_basic_block_forward)(params, x)
    jax.block_until_ready(out2)

    # ---- sanity checks against a pure-JAX mirror of the fused kernels ----
    zeros = jnp.zeros((B, T, H, W, C), jnp.float32)

    # bf16 folded-weight conv path stays close to the true f32 convolution
    y1_ref = ref_conv_bn_bf16(x, params['w1'], params['s1'], params['b1'])
    y1_f32 = ref_conv_bn_f32(x, params['w1'], params['s1'], params['b1'])
    assert jnp.allclose(y1_ref, y1_f32, atol=1e-1, rtol=2e-2), "bf16 conv drifted from f32 conv"

    # Spike outputs: allow a tiny fraction of boundary flips (a membrane landing within
    # float-eps of the threshold can flip between the Pallas MXU path and the XLA reference).
    out1_ref = ref_if(y1_ref, zeros, params['alpha1'])
    m1 = _spike_mismatch(out1, out1_ref)
    assert m1 <= 2e-3, f"part1 spike mismatch {m1 * 100:.3f}%"

    y2_ref = ref_conv_bn_bf16(out1, params['w2'], params['s2'], params['b2'])
    out2_ref = ref_if(y2_ref + x, zeros, params['alpha2'])   # same add order as the kernel
    m2 = _spike_mismatch(out2, out2_ref)
    assert m2 <= 2e-3, f"part2 spike mismatch {m2 * 100:.3f}%"

    print("KERNEL_OK")
</pallas_src>

<mosaic_0001>
module attributes {stable_mosaic.version = 11 : i64} {
  func.func @kernel(%arg0: i32, %arg1: memref<1xf32, #tpu.memory_space<smem>>, %arg2: memref<1x48x432xbf16, #tpu.memory_space<vmem>>, %arg3: memref<432x128xbf16, #tpu.memory_space<vmem>>, %arg4: memref<1x128xf32, #tpu.memory_space<vmem>>, %arg5: memref<1x128xf32, #tpu.memory_space<vmem>>, %arg6: memref<1x3x16x128xf32, #tpu.memory_space<vmem>>) attributes {dimension_semantics = [#tpu.dimension_semantics<parallel>], iteration_bounds = array<i64: 2>, scalar_prefetch = 0 : i64, scratch_operands = 0 : i64, tpu.core_type = #tpu.core_type<tc>, window_params = [{transform_indices = @transform_0, window_bounds = array<i64: 1>}, {transform_indices = @transform_1, window_bounds = array<i64: 1, 48, 432>}, {pipeline_mode = #tpu.pipeline_mode<synchronous>, transform_indices = @transform_2, window_bounds = array<i64: 432, 128>}, {pipeline_mode = #tpu.pipeline_mode<synchronous>, transform_indices = @transform_3, window_bounds = array<i64: 1, 128>}, {pipeline_mode = #tpu.pipeline_mode<synchronous>, transform_indices = @transform_4, window_bounds = array<i64: 1, 128>}, {transform_indices = @transform_5, window_bounds = array<i64: 1, 3, 16, 128>}]} {
    %c0 = arith.constant 0 : index
    %0 = memref.load %arg1[%c0] : memref<1xf32, #tpu.memory_space<smem>>
    %c0_0 = arith.constant 0 : index
    %c0_1 = arith.constant 0 : index
    %1 = vector.load %arg3[%c0_0, %c0_1] : memref<432x128xbf16, #tpu.memory_space<vmem>>, vector<432x128xbf16>
    %c0_2 = arith.constant 0 : index
    %c0_3 = arith.constant 0 : index
    %2 = vector.load %arg4[%c0_2, %c0_3] : memref<1x128xf32, #tpu.memory_space<vmem>>, vector<1x128xf32>
    %c0_4 = arith.constant 0 : index
    %c0_5 = arith.constant 0 : index
    %3 = vector.load %arg5[%c0_4, %c0_5] : memref<1x128xf32, #tpu.memory_space<vmem>>, vector<1x128xf32>
    %c0_6 = arith.constant 0 : index
    %c0_7 = arith.constant 0 : index
    %c0_8 = arith.constant 0 : index
    %4 = vector.load %arg2[%c0_6, %c0_7, %c0_8] : memref<1x48x432xbf16, #tpu.memory_space<vmem>>, vector<1x48x432xbf16>
    %5 = vector.shape_cast %4 : vector<1x48x432xbf16> to vector<48x432xbf16>
    %cst = arith.constant dense<0.000000e+00> : vector<48x128xf32>
    %6 = tpu.matmul %5, %1, %cst {dimension_numbers = #tpu.dot_dimension_numbers<[1], [0], [0], [1], [0, 0, 1, 1], [], []>} : vector<48x432xbf16>, vector<432x128xbf16>, vector<48x128xf32> -> vector<48x128xf32>
    %7 = vector.broadcast %2 : vector<1x128xf32> to vector<48x128xf32>
    %8 = arith.mulf %6, %7 : vector<48x128xf32>
    %9 = vector.broadcast %3 : vector<1x128xf32> to vector<48x128xf32>
    %10 = arith.addf %8, %9 : vector<48x128xf32>
    %cst_9 = arith.constant 0.000000e+00 : f32
    %11 = vector.broadcast %cst_9 : f32 to vector<16x128xf32>
    %cst_10 = arith.constant 5.000000e-01 : f32
    %12 = arith.mulf %cst_10, %0 : f32
    %13 = vector.broadcast %12 : f32 to vector<16x128xf32>
    %14 = arith.addf %11, %13 : vector<16x128xf32>
    %cst_11 = arith.constant 0.000000e+00 : f32
    %15 = vector.broadcast %cst_11 : f32 to vector<16x128xf32>
    %16 = vector.extract_strided_slice %10 {offsets = [0, 0], sizes = [16, 128], strides = [1, 1]} : vector<48x128xf32> to vector<16x128xf32>
    %17 = arith.addf %14, %16 : vector<16x128xf32>
    %18 = vector.broadcast %0 : f32 to vector<16x128xf32>
    %19 = arith.cmpf oge, %17, %18 : vector<16x128xf32>
    %20 = vector.broadcast %0 : f32 to vector<16x128xf32>
    %21 = arith.subf %17, %20 : vector<16x128xf32>
    %22 = arith.select %19, %21, %17 : vector<16x128xi1>, vector<16x128xf32>
    %23 = arith.extui %19 : vector<16x128xi1> to vector<16x128xi32>
    %24 = arith.sitofp %23 : vector<16x128xi32> to vector<16x128xf32>
    %25 = arith.addf %15, %24 : vector<16x128xf32>
    %cst_12 = arith.constant -1.000000e-03 : f32
    %26 = vector.broadcast %cst_12 : f32 to vector<16x128xf32>
    %27 = arith.cmpf ole, %22, %26 : vector<16x128xf32>
    %cst_13 = arith.constant 0.000000e+00 : f32
    %28 = vector.broadcast %cst_13 : f32 to vector<16x128xf32>
    %29 = arith.cmpf ogt, %25, %28 : vector<16x128xf32>
    %30 = arith.andi %27, %29 : vector<16x128xi1>
    %31 = vector.broadcast %0 : f32 to vector<16x128xf32>
    %32 = arith.addf %22, %31 : vector<16x128xf32>
    %33 = arith.select %30, %32, %22 : vector<16x128xi1>, vector<16x128xf32>
    %34 = arith.extui %30 : vector<16x128xi1> to vector<16x128xi32>
    %35 = arith.sitofp %34 : vector<16x128xi32> to vector<16x128xf32>
    %36 = arith.subf %25, %35 : vector<16x128xf32>
    %37 = arith.subf %24, %35 : vector<16x128xf32>
    %38 = vector.broadcast %0 : f32 to vector<16x128xf32>
    %39 = arith.mulf %37, %38 : vector<16x128xf32>
    %c0_14 = arith.constant 0 : index
    %c0_15 = arith.constant 0 : index
    %c0_16 = arith.constant 0 : index
    %c0_17 = arith.constant 0 : index
    %40 = vector.load %arg6[%c0_14, %c0_15, %c0_16, %c0_17] : memref<1x3x16x128xf32, #tpu.memory_space<vmem>>, vector<1x1x16x128xf32>
    %41 = vector.shape_cast %40 : vector<1x1x16x128xf32> to vector<16x128xf32>
    %42 = vector.shape_cast %39 : vector<16x128xf32> to vector<1x1x16x128xf32>
    tpu.vector_store %arg6[%c0_14, %c0_15, %c0_16, %c0_17], %42 {strides = array<i32>} : memref<1x3x16x128xf32, #tpu.memory_space<vmem>>, vector<1x1x16x128xf32>,
    %43 = vector.extract_strided_slice %10 {offsets = [16, 0], sizes = [16, 128], strides = [1, 1]} : vector<48x128xf32> to vector<16x128xf32>
    %44 = arith.addf %33, %43 : vector<16x128xf32>
    %45 = vector.broadcast %0 : f32 to vector<16x128xf32>
    %46 = arith.cmpf oge, %44, %45 : vector<16x128xf32>
    %47 = vector.broadcast %0 : f32 to vector<16x128xf32>
    %48 = arith.subf %44, %47 : vector<16x128xf32>
    %49 = arith.select %46, %48, %44 : vector<16x128xi1>, vector<16x128xf32>
    %50 = arith.extui %46 : vector<16x128xi1> to vector<16x128xi32>
    %51 = arith.sitofp %50 : vector<16x128xi32> to vector<16x128xf32>
    %52 = arith.addf %36, %51 : vector<16x128xf32>
    %cst_18 = arith.constant -1.000000e-03 : f32
    %53 = vector.broadcast %cst_18 : f32 to vector<16x128xf32>
    %54 = arith.cmpf ole, %49, %53 : vector<16x128xf32>
    %cst_19 = arith.constant 0.000000e+00 : f32
    %55 = vector.broadcast %cst_19 : f32 to vector<16x128xf32>
    %56 = arith.cmpf ogt, %52, %55 : vector<16x128xf32>
    %57 = arith.andi %54, %56 : vector<16x128xi1>
    %58 = vector.broadcast %0 : f32 to vector<16x128xf32>
    %59 = arith.addf %49, %58 : vector<16x128xf32>
    %60 = arith.select %57, %59, %49 : vector<16x128xi1>, vector<16x128xf32>
    %61 = arith.extui %57 : vector<16x128xi1> to vector<16x128xi32>
    %62 = arith.sitofp %61 : vector<16x128xi32> to vector<16x128xf32>
    %63 = arith.subf %52, %62 : vector<16x128xf32>
    %64 = arith.subf %51, %62 : vector<16x128xf32>
    %65 = vector.broadcast %0 : f32 to vector<16x128xf32>
    %66 = arith.mulf %64, %65 : vector<16x128xf32>
    %c0_20 = arith.constant 0 : index
    %c1 = arith.constant 1 : index
    %c0_21 = arith.constant 0 : index
    %c0_22 = arith.constant 0 : index
    %67 = vector.load %arg6[%c0_20, %c1, %c0_21, %c0_22] : memref<1x3x16x128xf32, #tpu.memory_space<vmem>>, vector<1x1x16x128xf32>
    %68 = vector.shape_cast %67 : vector<1x1x16x128xf32> to vector<16x128xf32>
    %69 = vector.shape_cast %66 : vector<16x128xf32> to vector<1x1x16x128xf32>
    tpu.vector_store %arg6[%c0_20, %c1, %c0_21, %c0_22], %69 {strides = array<i32>} : memref<1x3x16x128xf32, #tpu.memory_space<vmem>>, vector<1x1x16x128xf32>,
    %70 = vector.extract_strided_slice %10 {offsets = [32, 0], sizes = [16, 128], strides = [1, 1]} : vector<48x128xf32> to vector<16x128xf32>
    %71 = arith.addf %60, %70 : vector<16x128xf32>
    %72 = vector.broadcast %0 : f32 to vector<16x128xf32>
    %73 = arith.cmpf oge, %71, %72 : vector<16x128xf32>
    %74 = vector.broadcast %0 : f32 to vector<16x128xf32>
    %75 = arith.subf %71, %74 : vector<16x128xf32>
    %76 = arith.select %73, %75, %71 : vector<16x128xi1>, vector<16x128xf32>
    %77 = arith.extui %73 : vector<16x128xi1> to vector<16x128xi32>
    %78 = arith.sitofp %77 : vector<16x128xi32> to vector<16x128xf32>
    %79 = arith.addf %63, %78 : vector<16x128xf32>
    %cst_23 = arith.constant -1.000000e-03 : f32
    %80 = vector.broadcast %cst_23 : f32 to vector<16x128xf32>
    %81 = arith.cmpf ole, %76, %80 : vector<16x128xf32>
    %cst_24 = arith.constant 0.000000e+00 : f32
    %82 = vector.broadcast %cst_24 : f32 to vector<16x128xf32>
    %83 = arith.cmpf ogt, %79, %82 : vector<16x128xf32>
    %84 = arith.andi %81, %83 : vector<16x128xi1>
    %85 = arith.extui %84 : vector<16x128xi1> to vector<16x128xi32>
    %86 = arith.sitofp %85 : vector<16x128xi32> to vector<16x128xf32>
    %87 = arith.subf %78, %86 : vector<16x128xf32>
    %88 = vector.broadcast %0 : f32 to vector<16x128xf32>
    %89 = arith.mulf %87, %88 : vector<16x128xf32>
    %c0_25 = arith.constant 0 : index
    %c2 = arith.constant 2 : index
    %c0_26 = arith.constant 0 : index
    %c0_27 = arith.constant 0 : index
    %90 = vector.load %arg6[%c0_25, %c2, %c0_26, %c0_27] : memref<1x3x16x128xf32, #tpu.memory_space<vmem>>, vector<1x1x16x128xf32>
    %91 = vector.shape_cast %90 : vector<1x1x16x128xf32> to vector<16x128xf32>
    %92 = vector.shape_cast %89 : vector<16x128xf32> to vector<1x1x16x128xf32>
    tpu.vector_store %arg6[%c0_25, %c2, %c0_26, %c0_27], %92 {strides = array<i32>} : memref<1x3x16x128xf32, #tpu.memory_space<vmem>>, vector<1x1x16x128xf32>,
    return
  }
  func.func @transform_0(%arg0: i32) -> i32 {
    %c0_i32 = arith.constant 0 : i32
    %c0_i32_0 = arith.constant 0 : i32
    return %c0_i32 : i32
  }
  func.func @transform_1(%arg0: i32) -> (i32, i32, i32) {
    %c0_i32 = arith.constant 0 : i32
    %c0_i32_0 = arith.constant 0 : i32
    %c0_i32_1 = arith.constant 0 : i32
    return %arg0, %c0_i32, %c0_i32_0 : i32, i32, i32
  }
  func.func @transform_2(%arg0: i32) -> (i32, i32) {
    %c0_i32 = arith.constant 0 : i32
    %c0_i32_0 = arith.constant 0 : i32
    %c0_i32_1 = arith.constant 0 : i32
    return %c0_i32, %c0_i32_0 : i32, i32
  }
  func.func @transform_3(%arg0: i32) -> (i32, i32) {
    %c0_i32 = arith.constant 0 : i32
    %c0_i32_0 = arith.constant 0 : i32
    %c0_i32_1 = arith.constant 0 : i32
    return %c0_i32, %c0_i32_0 : i32, i32
  }
  func.func @transform_4(%arg0: i32) -> (i32, i32) {
    %c0_i32 = arith.constant 0 : i32
    %c0_i32_0 = arith.constant 0 : i32
    %c0_i32_1 = arith.constant 0 : i32
    return %c0_i32, %c0_i32_0 : i32, i32
  }
  func.func @transform_5(%arg0: i32) -> (i32, i32, i32, i32) {
    %c0_i32 = arith.constant 0 : i32
    %c0_i32_0 = arith.constant 0 : i32
    %c0_i32_1 = arith.constant 0 : i32
    %c0_i32_2 = arith.constant 0 : i32
    return %arg0, %c0_i32, %c0_i32_0, %c0_i32_1 : i32, i32, i32, i32
  }
}

module attributes {stable_mosaic.version = 11 : i64} {
  func.func @kernel(%arg0: i32, %arg1: memref<1xf32, #tpu.memory_space<smem>>, %arg2: memref<1x48x432xbf16, #tpu.memory_space<vmem>>, %arg3: memref<432x128xbf16, #tpu.memory_space<vmem>>, %arg4: memref<1x128xf32, #tpu.memory_space<vmem>>, %arg5: memref<1x128xf32, #tpu.memory_space<vmem>>, %arg6: memref<1x3x16x128xf32, #tpu.memory_space<vmem>>, %arg7: memref<1x3x16x128xf32, #tpu.memory_space<vmem>>) attributes {dimension_semantics = [#tpu.dimension_semantics<parallel>], iteration_bounds = array<i64: 2>, scalar_prefetch = 0 : i64, scratch_operands = 0 : i64, tpu.core_type = #tpu.core_type<tc>, window_params = [{transform_indices = @transform_0, window_bounds = array<i64: 1>}, {transform_indices = @transform_1, window_bounds = array<i64: 1, 48, 432>}, {pipeline_mode = #tpu.pipeline_mode<synchronous>, transform_indices = @transform_2, window_bounds = array<i64: 432, 128>}, {pipeline_mode = #tpu.pipeline_mode<synchronous>, transform_indices = @transform_3, window_bounds = array<i64: 1, 128>}, {pipeline_mode = #tpu.pipeline_mode<synchronous>, transform_indices = @transform_4, window_bounds = array<i64: 1, 128>}, {transform_indices = @transform_5, window_bounds = array<i64: 1, 3, 16, 128>}, {transform_indices = @transform_6, window_bounds = array<i64: 1, 3, 16, 128>}]} {
    %c0 = arith.constant 0 : index
    %0 = memref.load %arg1[%c0] : memref<1xf32, #tpu.memory_space<smem>>
    %c0_0 = arith.constant 0 : index
    %c0_1 = arith.constant 0 : index
    %1 = vector.load %arg3[%c0_0, %c0_1] : memref<432x128xbf16, #tpu.memory_space<vmem>>, vector<432x128xbf16>
    %c0_2 = arith.constant 0 : index
    %c0_3 = arith.constant 0 : index
    %2 = vector.load %arg4[%c0_2, %c0_3] : memref<1x128xf32, #tpu.memory_space<vmem>>, vector<1x128xf32>
    %c0_4 = arith.constant 0 : index
    %c0_5 = arith.constant 0 : index
    %3 = vector.load %arg5[%c0_4, %c0_5] : memref<1x128xf32, #tpu.memory_space<vmem>>, vector<1x128xf32>
    %c0_6 = arith.constant 0 : index
    %c0_7 = arith.constant 0 : index
    %c0_8 = arith.constant 0 : index
    %4 = vector.load %arg2[%c0_6, %c0_7, %c0_8] : memref<1x48x432xbf16, #tpu.memory_space<vmem>>, vector<1x48x432xbf16>
    %5 = vector.shape_cast %4 : vector<1x48x432xbf16> to vector<48x432xbf16>
    %cst = arith.constant dense<0.000000e+00> : vector<48x128xf32>
    %6 = tpu.matmul %5, %1, %cst {dimension_numbers = #tpu.dot_dimension_numbers<[1], [0], [0], [1], [0, 0, 1, 1], [], []>} : vector<48x432xbf16>, vector<432x128xbf16>, vector<48x128xf32> -> vector<48x128xf32>
    %7 = vector.broadcast %2 : vector<1x128xf32> to vector<48x128xf32>
    %8 = arith.mulf %6, %7 : vector<48x128xf32>
    %9 = vector.broadcast %3 : vector<1x128xf32> to vector<48x128xf32>
    %10 = arith.addf %8, %9 : vector<48x128xf32>
    %cst_9 = arith.constant 0.000000e+00 : f32
    %11 = vector.broadcast %cst_9 : f32 to vector<16x128xf32>
    %cst_10 = arith.constant 5.000000e-01 : f32
    %12 = arith.mulf %cst_10, %0 : f32
    %13 = vector.broadcast %12 : f32 to vector<16x128xf32>
    %14 = arith.addf %11, %13 : vector<16x128xf32>
    %cst_11 = arith.constant 0.000000e+00 : f32
    %15 = vector.broadcast %cst_11 : f32 to vector<16x128xf32>
    %16 = vector.extract_strided_slice %10 {offsets = [0, 0], sizes = [16, 128], strides = [1, 1]} : vector<48x128xf32> to vector<16x128xf32>
    %c0_12 = arith.constant 0 : index
    %c0_13 = arith.constant 0 : index
    %c0_14 = arith.constant 0 : index
    %c0_15 = arith.constant 0 : index
    %17 = vector.load %arg6[%c0_12, %c0_13, %c0_14, %c0_15] : memref<1x3x16x128xf32, #tpu.memory_space<vmem>>, vector<1x1x16x128xf32>
    %18 = vector.shape_cast %17 : vector<1x1x16x128xf32> to vector<16x128xf32>
    %19 = arith.addf %16, %18 : vector<16x128xf32>
    %20 = arith.addf %14, %19 : vector<16x128xf32>
    %21 = vector.broadcast %0 : f32 to vector<16x128xf32>
    %22 = arith.cmpf oge, %20, %21 : vector<16x128xf32>
    %23 = vector.broadcast %0 : f32 to vector<16x128xf32>
    %24 = arith.subf %20, %23 : vector<16x128xf32>
    %25 = arith.select %22, %24, %20 : vector<16x128xi1>, vector<16x128xf32>
    %26 = arith.extui %22 : vector<16x128xi1> to vector<16x128xi32>
    %27 = arith.sitofp %26 : vector<16x128xi32> to vector<16x128xf32>
    %28 = arith.addf %15, %27 : vector<16x128xf32>
    %cst_16 = arith.constant -1.000000e-03 : f32
    %29 = vector.broadcast %cst_16 : f32 to vector<16x128xf32>
    %30 = arith.cmpf ole, %25, %29 : vector<16x128xf32>
    %cst_17 = arith.constant 0.000000e+00 : f32
    %31 = vector.broadcast %cst_17 : f32 to vector<16x128xf32>
    %32 = arith.cmpf ogt, %28, %31 : vector<16x128xf32>
    %33 = arith.andi %30, %32 : vector<16x128xi1>
    %34 = vector.broadcast %0 : f32 to vector<16x128xf32>
    %35 = arith.addf %25, %34 : vector<16x128xf32>
    %36 = arith.select %33, %35, %25 : vector<16x128xi1>, vector<16x128xf32>
    %37 = arith.extui %33 : vector<16x128xi1> to vector<16x128xi32>
    %38 = arith.sitofp %37 : vector<16x128xi32> to vector<16x128xf32>
    %39 = arith.subf %28, %38 : vector<16x128xf32>
    %40 = arith.subf %27, %38 : vector<16x128xf32>
    %41 = vector.broadcast %0 : f32 to vector<16x128xf32>
    %42 = arith.mulf %40, %41 : vector<16x128xf32>
    %c0_18 = arith.constant 0 : index
    %c0_19 = arith.constant 0 : index
    %c0_20 = arith.constant 0 : index
    %c0_21 = arith.constant 0 : index
    %43 = vector.load %arg7[%c0_18, %c0_19, %c0_20, %c0_21] : memref<1x3x16x128xf32, #tpu.memory_space<vmem>>, vector<1x1x16x128xf32>
    %44 = vector.shape_cast %43 : vector<1x1x16x128xf32> to vector<16x128xf32>
    %45 = vector.shape_cast %42 : vector<16x128xf32> to vector<1x1x16x128xf32>
    tpu.vector_store %arg7[%c0_18, %c0_19, %c0_20, %c0_21], %45 {strides = array<i32>} : memref<1x3x16x128xf32, #tpu.memory_space<vmem>>, vector<1x1x16x128xf32>,
    %46 = vector.extract_strided_slice %10 {offsets = [16, 0], sizes = [16, 128], strides = [1, 1]} : vector<48x128xf32> to vector<16x128xf32>
    %c0_22 = arith.constant 0 : index
    %c1 = arith.constant 1 : index
    %c0_23 = arith.constant 0 : index
    %c0_24 = arith.constant 0 : index
    %47 = vector.load %arg6[%c0_22, %c1, %c0_23, %c0_24] : memref<1x3x16x128xf32, #tpu.memory_space<vmem>>, vector<1x1x16x128xf32>
    %48 = vector.shape_cast %47 : vector<1x1x16x128xf32> to vector<16x128xf32>
    %49 = arith.addf %46, %48 : vector<16x128xf32>
    %50 = arith.addf %36, %49 : vector<16x128xf32>
    %51 = vector.broadcast %0 : f32 to vector<16x128xf32>
    %52 = arith.cmpf oge, %50, %51 : vector<16x128xf32>
    %53 = vector.broadcast %0 : f32 to vector<16x128xf32>
    %54 = arith.subf %50, %53 : vector<16x128xf32>
    %55 = arith.select %52, %54, %50 : vector<16x128xi1>, vector<16x128xf32>
    %56 = arith.extui %52 : vector<16x128xi1> to vector<16x128xi32>
    %57 = arith.sitofp %56 : vector<16x128xi32> to vector<16x128xf32>
    %58 = arith.addf %39, %57 : vector<16x128xf32>
    %cst_25 = arith.constant -1.000000e-03 : f32
    %59 = vector.broadcast %cst_25 : f32 to vector<16x128xf32>
    %60 = arith.cmpf ole, %55, %59 : vector<16x128xf32>
    %cst_26 = arith.constant 0.000000e+00 : f32
    %61 = vector.broadcast %cst_26 : f32 to vector<16x128xf32>
    %62 = arith.cmpf ogt, %58, %61 : vector<16x128xf32>
    %63 = arith.andi %60, %62 : vector<16x128xi1>
    %64 = vector.broadcast %0 : f32 to vector<16x128xf32>
    %65 = arith.addf %55, %64 : vector<16x128xf32>
    %66 = arith.select %63, %65, %55 : vector<16x128xi1>, vector<16x128xf32>
    %67 = arith.extui %63 : vector<16x128xi1> to vector<16x128xi32>
    %68 = arith.sitofp %67 : vector<16x128xi32> to vector<16x128xf32>
    %69 = arith.subf %58, %68 : vector<16x128xf32>
    %70 = arith.subf %57, %68 : vector<16x128xf32>
    %71 = vector.broadcast %0 : f32 to vector<16x128xf32>
    %72 = arith.mulf %70, %71 : vector<16x128xf32>
    %c0_27 = arith.constant 0 : index
    %c1_28 = arith.constant 1 : index
    %c0_29 = arith.constant 0 : index
    %c0_30 = arith.constant 0 : index
    %73 = vector.load %arg7[%c0_27, %c1_28, %c0_29, %c0_30] : memref<1x3x16x128xf32, #tpu.memory_space<vmem>>, vector<1x1x16x128xf32>
    %74 = vector.shape_cast %73 : vector<1x1x16x128xf32> to vector<16x128xf32>
    %75 = vector.shape_cast %72 : vector<16x128xf32> to vector<1x1x16x128xf32>
    tpu.vector_store %arg7[%c0_27, %c1_28, %c0_29, %c0_30], %75 {strides = array<i32>} : memref<1x3x16x128xf32, #tpu.memory_space<vmem>>, vector<1x1x16x128xf32>,
    %76 = vector.extract_strided_slice %10 {offsets = [32, 0], sizes = [16, 128], strides = [1, 1]} : vector<48x128xf32> to vector<16x128xf32>
    %c0_31 = arith.constant 0 : index
    %c2 = arith.constant 2 : index
    %c0_32 = arith.constant 0 : index
    %c0_33 = arith.constant 0 : index
    %77 = vector.load %arg6[%c0_31, %c2, %c0_32, %c0_33] : memref<1x3x16x128xf32, #tpu.memory_space<vmem>>, vector<1x1x16x128xf32>
    %78 = vector.shape_cast %77 : vector<1x1x16x128xf32> to vector<16x128xf32>
    %79 = arith.addf %76, %78 : vector<16x128xf32>
    %80 = arith.addf %66, %79 : vector<16x128xf32>
    %81 = vector.broadcast %0 : f32 to vector<16x128xf32>
    %82 = arith.cmpf oge, %80, %81 : vector<16x128xf32>
    %83 = vector.broadcast %0 : f32 to vector<16x128xf32>
    %84 = arith.subf %80, %83 : vector<16x128xf32>
    %85 = arith.select %82, %84, %80 : vector<16x128xi1>, vector<16x128xf32>
    %86 = arith.extui %82 : vector<16x128xi1> to vector<16x128xi32>
    %87 = arith.sitofp %86 : vector<16x128xi32> to vector<16x128xf32>
    %88 = arith.addf %69, %87 : vector<16x128xf32>
    %cst_34 = arith.constant -1.000000e-03 : f32
    %89 = vector.broadcast %cst_34 : f32 to vector<16x128xf32>
    %90 = arith.cmpf ole, %85, %89 : vector<16x128xf32>
    %cst_35 = arith.constant 0.000000e+00 : f32
    %91 = vector.broadcast %cst_35 : f32 to vector<16x128xf32>
    %92 = arith.cmpf ogt, %88, %91 : vector<16x128xf32>
    %93 = arith.andi %90, %92 : vector<16x128xi1>
    %94 = arith.extui %93 : vector<16x128xi1> to vector<16x128xi32>
    %95 = arith.sitofp %94 : vector<16x128xi32> to vector<16x128xf32>
    %96 = arith.subf %87, %95 : vector<16x128xf32>
    %97 = vector.broadcast %0 : f32 to vector<16x128xf32>
    %98 = arith.mulf %96, %97 : vector<16x128xf32>
    %c0_36 = arith.constant 0 : index
    %c2_37 = arith.constant 2 : index
    %c0_38 = arith.constant 0 : index
    %c0_39 = arith.constant 0 : index
    %99 = vector.load %arg7[%c0_36, %c2_37, %c0_38, %c0_39] : memref<1x3x16x128xf32, #tpu.memory_space<vmem>>, vector<1x1x16x128xf32>
    %100 = vector.shape_cast %99 : vector<1x1x16x128xf32> to vector<16x128xf32>
    %101 = vector.shape_cast %98 : vector<16x128xf32> to vector<1x1x16x128xf32>
    tpu.vector_store %arg7[%c0_36, %c2_37, %c0_38, %c0_39], %101 {strides = array<i32>} : memref<1x3x16x128xf32, #tpu.memory_space<vmem>>, vector<1x1x16x128xf32>,
    return
  }
  func.func @transform_0(%arg0: i32) -> i32 {
    %c0_i32 = arith.constant 0 : i32
    %c0_i32_0 = arith.constant 0 : i32
    return %c0_i32 : i32
  }
  func.func @transform_1(%arg0: i32) -> (i32, i32, i32) {
    %c0_i32 = arith.constant 0 : i32
    %c0_i32_0 = arith.constant 0 : i32
    %c0_i32_1 = arith.constant 0 : i32
    return %arg0, %c0_i32, %c0_i32_0 : i32, i32, i32
  }
  func.func @transform_2(%arg0: i32) -> (i32, i32) {
    %c0_i32 = arith.constant 0 : i32
    %c0_i32_0 = arith.constant 0 : i32
    %c0_i32_1 = arith.constant 0 : i32
    return %c0_i32, %c0_i32_0 : i32, i32
  }
  func.func @transform_3(%arg0: i32) -> (i32, i32) {
    %c0_i32 = arith.constant 0 : i32
    %c0_i32_0 = arith.constant 0 : i32
    %c0_i32_1 = arith.constant 0 : i32
    return %c0_i32, %c0_i32_0 : i32, i32
  }
  func.func @transform_4(%arg0: i32) -> (i32, i32) {
    %c0_i32 = arith.constant 0 : i32
    %c0_i32_0 = arith.constant 0 : i32
    %c0_i32_1 = arith.constant 0 : i32
    return %c0_i32, %c0_i32_0 : i32, i32
  }
  func.func @transform_5(%arg0: i32) -> (i32, i32, i32, i32) {
    %c0_i32 = arith.constant 0 : i32
    %c0_i32_0 = arith.constant 0 : i32
    %c0_i32_1 = arith.constant 0 : i32
    %c0_i32_2 = arith.constant 0 : i32
    return %arg0, %c0_i32, %c0_i32_0, %c0_i32_1 : i32, i32, i32, i32
  }
  func.func @transform_6(%arg0: i32) -> (i32, i32, i32, i32) {
    %c0_i32 = arith.constant 0 : i32
    %c0_i32_0 = arith.constant 0 : i32
    %c0_i32_1 = arith.constant 0 : i32
    %c0_i32_2 = arith.constant 0 : i32
    return %arg0, %c0_i32, %c0_i32_0, %c0_i32_1 : i32, i32, i32, i32
  }
}

</mosaic_0001>

<llo_original>
// kernel: tile.23
$region0: #{tile.23}
  #allocation0 [shape = 's32[1]{0}', space=sflag, size = 0x4, scoped, tag = 'scoped memory for tile.23']
  %s0 = inlined_call_operand.vmem [shape: f32[8], index: 0, kind: input, shape index: {}]
  %s1 = inlined_call_operand.vmem [shape: f32[16,8], index: 1, kind: output, shape index: {}]
  // Predicated region
  $region2: #{tile.23} parent=0 // pred_check
    _
  $region3: #{tile.23} parent=0 // pred_check_branch
    %3 = sbr.rel (0) target = $region5
  $region4: #{tile.23} parent=0 // pred_region
    _
  $region5: #{tile.23} parent=0 // pred_fallthru
    _
  %v4 = vld [vmem:[%s0] ss:$0 sm:$0xff]
  %5 = vst [vmem:[%s1] sm:$0xff] %v4
  %s6 = scalar_lea.vmem %s1, 8
  %7 = vst [vmem:[%s6] sm:$0xff] %v4

// kernel: tile.24
$region0: #{tile.24}
  %s0 = inlined_call_operand.vmem [shape: f32[16,8], index: 0, kind: input, shape index: {}]
  %s1 = inlined_call_operand.vmem [shape: f32[1,128], index: 1, kind: output, shape index: {}]
  $region1: #{tile.24} parent=0
    #allocation0 [shape = 'u8[4096]{0}', space=vmem, size = 0x1000, scoped, tag = 'scoped mem for output reshape']
    %v2 = vld [vmem:[%s0] sm:$0x1]
    %vm3 = vcmask 64512
    %4 = vst.msk [vmem:[#allocation0] sm:$0x1] %vm3, %v2
    %s5 = scalar_lea.vmem %s0, 15
    %v6 = vld [vmem:[%s5] sm:$0x1]
    %7 = vrot.lane.b32.xlu0 %v6, 120
    %v8 = vpop.permute.xlu0 %7
    %vm9 = vcmask 1048512
    %10 = vst.msk [vmem:[#allocation0] sm:$0x1] %vm9, %v8
    %s11 = scalar_lea.vmem %s0, 14
    %v12 = vld [vmem:[%s11] sm:$0x1]
    %13 = vrot.lane.b32.xlu0 %v12, 112
    %v14 = vpop.permute.xlu0 %13
    %vm15 = vcmask 982912
    %16 = vst.msk [vmem:[#allocation0] sm:$0x1] %vm15, %v14
    %s17 = scalar_lea.vmem %s0, 13
    %v18 = vld [vmem:[%s17] sm:$0x1]
    %19 = vrot.lane.b32.xlu0 %v18, 104
    %v20 = vpop.permute.xlu0 %19
    %vm21 = vcmask 917312
    %22 = vst.msk [vmem:[#allocation0] sm:$0x1] %vm21, %v20
    %s23 = scalar_lea.vmem %s0, 12
    %v24 = vld [vmem:[%s23] sm:$0x1]
    %25 = vrot.lane.b32.xlu0 %v24, 96
    %v26 = vpop.permute.xlu0 %25
    %vm27 = vcmask 851712
    %28 = vst.msk [vmem:[#allocation0] sm:$0x1] %vm27, %v26
    %s29 = scalar_lea.vmem %s0, 11
    %v30 = vld [vmem:[%s29] sm:$0x1]
    %31 = vrot.lane.b32.xlu0 %v30, 88
    %v32 = vpop.permute.xlu0 %31
    %vm33 = vcmask 786112
    %34 = vst.msk [vmem:[#allocation0] sm:$0x1] %vm33, %v32
    %s35 = scalar_lea.vmem %s0, 10
    %v36 = vld [vmem:[%s35] sm:$0x1]
    %37 = vrot.lane.b32.xlu0 %v36, 80
    %v38 = vpop.permute.xlu0 %37
    %vm39 = vcmask 720512
    %40 = vst.msk [vmem:[#allocation0] sm:$0x1] %vm39, %v38
    %s41 = scalar_lea.vmem %s0, 9
    %v42 = vld [vmem:[%s41] sm:$0x1]
    %43 = vrot.lane.b32.xlu0 %v42, 72
    %v44 = vpop.permute.xlu0 %43
    %vm45 = vcmask 654912
    %46 = vst.msk [vmem:[#allocation0] sm:$0x1] %vm45, %v44
    %s47 = scalar_lea.vmem %s0, 8
    %v48 = vld [vmem:[%s47] sm:$0x1]
    %49 = vrot.lane.b32.xlu0 %v48, 64
    %v50 = vpop.permute.xlu0 %49
    %vm51 = vcmask 589312
    %52 = vst.msk [vmem:[#allocation0] sm:$0x1] %vm51, %v50
    %s53 = scalar_lea.vmem %s0, 7
    %v54 = vld [vmem:[%s53] sm:$0x1]
    %55 = vrot.lane.b32.xlu0 %v54, 56
    %v56 = vpop.permute.xlu0 %55
    %vm57 = vcmask 523712
    %58 = vst.msk [vmem:[#allocation0] sm:$0x1] %vm57, %v56
    %s59 = scalar_lea.vmem %s0, 6
    %v60 = vld [vmem:[%s59] sm:$0x1]
    %61 = vrot.lane.b32.xlu0 %v60, 48
    %v62 = vpop.permute.xlu0 %61
    %vm63 = vcmask 458112
    %64 = vst.msk [vmem:[#allocation0] sm:$0x1] %vm63, %v62
    %s65 = scalar_lea.vmem %s0, 5
    %v66 = vld [vmem:[%s65] sm:$0x1]
    %67 = vrot.lane.b32.xlu0 %v66, 40
    %v68 = vpop.permute.xlu0 %67
    %vm69 = vcmask 392512
    %70 = vst.msk [vmem:[#allocation0] sm:$0x1] %vm69, %v68
    %s71 = scalar_lea.vmem %s0, 4
    %v72 = vld [vmem:[%s71] sm:$0x1]
    %73 = vrot.lane.b32.xlu0 %v72, 32
    %v74 = vpop.permute.xlu0 %73
    %vm75 = vcmask 326912
    %76 = vst.msk [vmem:[#allocation0] sm:$0x1] %vm75, %v74
    %s77 = scalar_lea.vmem %s0, 3
    %v78 = vld [vmem:[%s77] sm:$0x1]
    %79 = vrot.lane.b32.xlu0 %v78, 24
    %v80 = vpop.permute.xlu0 %79
    %vm81 = vcmask 261312
    %82 = vst.msk [vmem:[#allocation0] sm:$0x1] %vm81, %v80
    %s83 = scalar_lea.vmem %s0, 2
    %v84 = vld [vmem:[%s83] sm:$0x1]
    %85 = vrot.lane.b32.xlu0 %v84, 16
    %v86 = vpop.permute.xlu0 %85
    %vm87 = vcmask 195712
    %88 = vst.msk [vmem:[#allocation0] sm:$0x1] %vm87, %v86
    %s89 = scalar_lea.vmem %s0, 1
    %v90 = vld [vmem:[%s89] sm:$0x1]
    %91 = vrot.lane.b32.xlu0 %v90, 8
    %v92 = vpop.permute.xlu0 %91
    %vm93 = vcmask 130112
    %94 = vst.msk [vmem:[#allocation0] sm:$0x1] %vm93, %v92
    %s96 = ssub.s32 2, 1
    %v97 = vld [vmem:[#allocation0] sm:%s96]
    %s99 = ssub.s32 2, 1
    %100 = vst [vmem:[%s1] sm:%s99] %v97

// kernel: spiking_basic_block_forward.2
$region0: #{spiking_basic_block_forward.2}
  #allocation0 [shape = 'u32[]', space=smem, size = 0x4, offset = 0x4, fixed_abs, tag = 'smem constant byte address 0x4 - core index']
  #allocation1 [shape = 'u32[72,128]{1,0:T(1,128)}', space=vmem, size = 0x9000, scoped, tag = 'internal scratch']
  #allocation2 [shape = 'f32[1]{0:T(128)S(6)}', space=smem, size = 0x200, scoped, tag = 'scoped memory for spiking_basic_block_forward.2']
  %s0 = inlined_call_operand.<no memory space> [shape: f32[1], index: 0, kind: input, shape index: {}]
  %s1 = inlined_call_operand.vmem [shape: bf16[2,48,432], index: 1, kind: input, shape index: {}]
  %s2 = inlined_call_operand.vmem [shape: bf16[432,128], index: 2, kind: input, shape index: {}]
  %s3 = inlined_call_operand.vmem [shape: f32[1,128], index: 3, kind: input, shape index: {}]
  %s4 = inlined_call_operand.vmem [shape: f32[1,128], index: 4, kind: input, shape index: {}]
  %s5 = inlined_call_operand.vmem [shape: f32[2,3,16,128], index: 5, kind: output, shape index: {}]
  %s6 = sld [smem:[#allocation0]]
  $region53: #{spiking_basic_block_forward.2} parent=0
    _
  %s8 = ssub.s32 1, %s6
  %s9 = scalar_select 0, %s8, %s6
  %10 = sst [smem:[#allocation2]] %s0
  loop: start=0, step=1, limit=4
  $region2: #{spiking_basic_block_forward.2} parent=0 // loop_pre_header
    _
  $region3: #{spiking_basic_block_forward.2} parent=0 // loop_header
    %s12 = sphi 0, %s16
    %p13 = scmp.ge.s32.totalorder %s12, 4
    %s20 = sphi 0, %s20
    %s22 = sphi 0, %s20
    %s23 = sphi 0, %s22
    %s37 = sphi 0, %s23
    %s43 = sphi 0, %s45
    %s46 = sphi 0, %s43
    %s47 = sphi 0, %s46
    %s63 = sphi 0, %s47
    %s67 = sphi 0, %s67
    %s69 = sphi 0, %s67
    %s70 = sphi 0, %s69
    %s84 = sphi 0, %s70
    %s88 = sphi 0, %s88
    %s90 = sphi 0, %s88
    %s91 = sphi 0, %s90
    %s105 = sphi 0, %s91
    %s109 = sphi 0, %s109
    %s111 = sphi 0, %s109
    %s112 = sphi 0, %s111
    %s126 = sphi 0, %s112
    %s132 = sphi 0, %s134
    %s135 = sphi 0, %s132
    %s136 = sphi 0, %s135
    %s152 = sphi 0, %s136
  $region4: #{spiking_basic_block_forward.2} parent=0 // loop_header_branch
    %15 = sbr.rel (%p13) target = $region8
  $region5: #{spiking_basic_block_forward.2} parent=0 // loop_body
    %s17 = ssub.s32 %s12, 1
    %s18 = ssub.s32 %s12, 2
    %s19 = sadd.s32 %s12, 1
    %s21 = sadd.s32 %s20, 1
    %p24 = scmp.eq.s32.totalorder %s12, 1
    %p25 = scmp.ne.s32.totalorder %s20, %s22
    %p26 = scmp.eq.s32.totalorder %s12, 0
    %p27 = por %p25, %p26
    %p28 = scmp.ne.s32.totalorder %s20, %s22
    %p29 = scmp.eq.s32.totalorder %s17, 1
    %p30 = por %p28, %p29
    %p31 = scmp.ne.s32.totalorder %s22, %s23
    %p32 = scmp.eq.s32.totalorder %s17, 0
    %p33 = por %p31, %p32
    %p34 = scmp.ne.s32.totalorder %s22, %s23
    %p35 = scmp.eq.s32.totalorder %s18, 1
    %p36 = por %p34, %p35
    %p38 = scmp.ne.s32.totalorder %s23, %s37
    %p39 = scmp.eq.s32.totalorder %s18, 0
    %p40 = por %p38, %p39
    %s41 = ssub.s32 %s12, %s19
    %p42 = scmp.eq.s32.totalorder %s41, 0
    %s44 = sadd.s32 %s43, 1
    %s45 = scalar_select %p42, %s43, %s44
    %p48 = pneg %p42
    %p49 = scmp.eq.s32.totalorder %s12, 1
    %p50 = por %p48, %p49
    %p51 = scmp.ne.s32.totalorder %s43, %s46
    %p52 = scmp.eq.s32.totalorder %s12, 0
    %p53 = por %p51, %p52
    %p54 = scmp.ne.s32.totalorder %s43, %s46
    %p55 = scmp.eq.s32.totalorder %s17, 1
    %p56 = por %p54, %p55
    %p57 = scmp.ne.s32.totalorder %s46, %s47
    %p58 = scmp.eq.s32.totalorder %s17, 0
    %p59 = por %p57, %p58
    %p60 = scmp.ne.s32.totalorder %s46, %s47
    %p61 = scmp.eq.s32.totalorder %s18, 1
    %p62 = por %p60, %p61
    %p64 = scmp.ne.s32.totalorder %s47, %s63
    %p65 = scmp.eq.s32.totalorder %s18, 0
    %p66 = por %p64, %p65
    %s68 = sadd.s32 %s67, 1
    %p71 = scmp.eq.s32.totalorder %s12, 1
    %p72 = scmp.ne.s32.totalorder %s67, %s69
    %p73 = scmp.eq.s32.totalorder %s12, 0
    %p74 = por %p72, %p73
    %p75 = scmp.ne.s32.totalorder %s67, %s69
    %p76 = scmp.eq.s32.totalorder %s17, 1
    %p77 = por %p75, %p76
    %p78 = scmp.ne.s32.totalorder %s69, %s70
    %p79 = scmp.eq.s32.totalorder %s17, 0
    %p80 = por %p78, %p79
    %p81 = scmp.ne.s32.totalorder %s69, %s70
    %p82 = scmp.eq.s32.totalorder %s18, 1
    %p83 = por %p81, %p82
    %p85 = scmp.ne.s32.totalorder %s70, %s84
    %p86 = scmp.eq.s32.totalorder %s18, 0
    %p87 = por %p85, %p86
    %s89 = sadd.s32 %s88, 1
    %p92 = scmp.eq.s32.totalorder %s12, 1
    %p93 = scmp.ne.s32.totalorder %s88, %s90
    %p94 = scmp.eq.s32.totalorder %s12, 0
    %p95 = por %p93, %p94
    %p96 = scmp.ne.s32.totalorder %s88, %s90
    %p97 = scmp.eq.s32.totalorder %s17, 1
    %p98 = por %p96, %p97
    %p99 = scmp.ne.s32.totalorder %s90, %s91
    %p100 = scmp.eq.s32.totalorder %s17, 0
    %p101 = por %p99, %p100
    %p102 = scmp.ne.s32.totalorder %s90, %s91
    %p103 = scmp.eq.s32.totalorder %s18, 1
    %p104 = por %p102, %p103
    %p106 = scmp.ne.s32.totalorder %s91, %s105
    %p107 = scmp.eq.s32.totalorder %s18, 0
    %p108 = por %p106, %p107
    %s110 = sadd.s32 %s109, 1
    %p113 = scmp.eq.s32.totalorder %s12, 1
    %p114 = scmp.ne.s32.totalorder %s109, %s111
    %p115 = scmp.eq.s32.totalorder %s12, 0
    %p116 = por %p114, %p115
    %p117 = scmp.ne.s32.totalorder %s109, %s111
    %p118 = scmp.eq.s32.totalorder %s17, 1
    %p119 = por %p117, %p118
    %p120 = scmp.ne.s32.totalorder %s111, %s112
    %p121 = scmp.eq.s32.totalorder %s17, 0
    %p122 = por %p120, %p121
    %p123 = scmp.ne.s32.totalorder %s111, %s112
    %p124 = scmp.eq.s32.totalorder %s18, 1
    %p125 = por %p123, %p124
    %p127 = scmp.ne.s32.totalorder %s112, %s126
    %p128 = scmp.eq.s32.totalorder %s18, 0
    %p129 = por %p127, %p128
    %s130 = ssub.s32 %s12, %s19
    %p131 = scmp.eq.s32.totalorder %s130, 0
    %s133 = sadd.s32 %s132, 1
    %s134 = scalar_select %p131, %s132, %s133
    %p137 = pneg %p131
    %p138 = scmp.eq.s32.totalorder %s12, 1
    %p139 = por %p137, %p138
    %p140 = scmp.ne.s32.totalorder %s132, %s135
    %p141 = scmp.eq.s32.totalorder %s12, 0
    %p142 = por %p140, %p141
    %p143 = scmp.ne.s32.totalorder %s132, %s135
    %p144 = scmp.eq.s32.totalorder %s17, 1
    %p145 = por %p143, %p144
    %p146 = scmp.ne.s32.totalorder %s135, %s136
    %p147 = scmp.eq.s32.totalorder %s17, 0
    %p148 = por %p146, %p147
    %p149 = scmp.ne.s32.totalorder %s135, %s136
    %p150 = scmp.eq.s32.totalorder %s18, 1
    %p151 = por %p149, %p150
    %p153 = scmp.ne.s32.totalorder %s136, %s152
    %p154 = scmp.eq.s32.totalorder %s18, 0
    %p155 = por %p153, %p154
    %p156 = scmp.le.s32.totalorder 1, %s12
    %p157 = scmp.lt.s32.totalorder %s12, 3
    %p158 = pnand %p156, %p157
    %p159 = pneg %p158
    // Predicated region
    $region9: #{spiking_basic_block_forward.2} parent=5 // pred_check
      _
    $region10: #{spiking_basic_block_forward.2} parent=5 // pred_check_branch
      %161 = sbr.rel (%p158) target = $region12
    $region11: #{spiking_basic_block_forward.2} parent=5 // pred_region
      %s162 = ssub.s32 %s12, 1
      // Predicated region
      $region13: #{spiking_basic_block_forward.2} parent=11 // pred_check
        %p163 = pneg %p33
      $region14: #{spiking_basic_block_forward.2} parent=11 // pred_check_branch
        %165 = sbr.rel (%p163) target = $region16
      $region15: #{spiking_basic_block_forward.2} parent=11 // pred_region
        _
      $region16: #{spiking_basic_block_forward.2} parent=11 // pred_fallthru
        _
      // Predicated region
      $region17: #{spiking_basic_block_forward.2} parent=11 // pred_check
        %p166 = pneg %p80
      $region18: #{spiking_basic_block_forward.2} parent=11 // pred_check_branch
        %168 = sbr.rel (%p166) target = $region20
      $region19: #{spiking_basic_block_forward.2} parent=11 // pred_region
        _
      $region20: #{spiking_basic_block_forward.2} parent=11 // pred_fallthru
        _
      // Predicated region
      $region21: #{spiking_basic_block_forward.2} parent=11 // pred_check
        %p169 = pneg %p101
      $region22: #{spiking_basic_block_forward.2} parent=11 // pred_check_branch
        %171 = sbr.rel (%p169) target = $region24
      $region23: #{spiking_basic_block_forward.2} parent=11 // pred_region
        _
      $region24: #{spiking_basic_block_forward.2} parent=11 // pred_fallthru
        _
      // Predicated region
      $region25: #{spiking_basic_block_forward.2} parent=11 // pred_check
        %p172 = pneg %p122
      $region26: #{spiking_basic_block_forward.2} parent=11 // pred_check_branch
        %174 = sbr.rel (%p172) target = $region28
      $region27: #{spiking_basic_block_forward.2} parent=11 // pred_region
        _
      $region28: #{spiking_basic_block_forward.2} parent=11 // pred_fallthru
        _
    $region12: #{spiking_basic_block_forward.2} parent=5 // pred_fallthru
      _
    %p175 = scmp.lt.s32.totalorder %s12, 2
    // Predicated region
    $region29: #{spiking_basic_block_forward.2} parent=5 // pred_check
      %p176 = pneg %p175
    $region30: #{spiking_basic_block_forward.2} parent=5 // pred_check_branch
      %178 = sbr.rel (%p176) target = $region32
    $region31: #{spiking_basic_block_forward.2} parent=5 // pred_region
      // Predicated region
      $region33: #{spiking_basic_block_forward.2} parent=31 // pred_check
        %p179 = pneg %p53
      $region34: #{spiking_basic_block_forward.2} parent=31 // pred_check_branch
        %181 = sbr.rel (%p179) target = $region36
      $region35: #{spiking_basic_block_forward.2} parent=31 // pred_region
        %p182 = scmp.lt.s32.totalorder %s12, 1
        %s183 = scalar_select %p182, %s12, 1
        %s184 = smul.addr %s183, 24
        %s185 = smul.addr %s184, 4
        %s186 = scalar_lea.vmem %s1, %s185
      $region36: #{spiking_basic_block_forward.2} parent=31 // pred_fallthru
        _
    $region32: #{spiking_basic_block_forward.2} parent=5 // pred_fallthru
      _
    %p187 = scmp.le.s32.totalorder 1, %s12
    %p188 = scmp.lt.s32.totalorder %s12, 3
    %p189 = pnand %p187, %p188
    %p190 = pneg %p189
    // Predicated region
    $region37: #{spiking_basic_block_forward.2} parent=5 // pred_check
      _
    $region38: #{spiking_basic_block_forward.2} parent=5 // pred_check_branch
      %192 = sbr.rel (%p189) target = $region40
    $region39: #{spiking_basic_block_forward.2} parent=5 // pred_region
      %s193 = ssub.s32 %s12, 1
      %p194 = pneg %p33
      %p195 = pneg %p30
      %p196 = scmp.lt.s32.totalorder %s17, 1
      %s197 = scalar_select %p196, %s17, 1
      %s198 = smul.addr %s197, 24
      %s199 = smul.addr %s198, 4
      %s200 = scalar_lea.vmem %s1, %s199
      %p201 = pneg %p59
      %p202 = pneg %p56
      %p203 = pneg %p80
      %p204 = pneg %p77
      %p205 = pneg %p101
      %p206 = pneg %p98
      %p207 = pneg %p122
      %p208 = pneg %p119
      %p209 = pneg %p148
      %p210 = pneg %p145
      %p211 = scmp.lt.s32.totalorder %s17, 1
      %s212 = scalar_select %p211, %s17, 1
      %s213 = smul.addr %s212, 6
      %s214 = smul.addr %s213, 8
      %s215 = scalar_lea.vmem %s5, %s214
      %p216 = scmp.lt.s32.totalorder %s17, 1
      %s217 = scalar_select %p216, %s17, 1
      %s218 = smul.addr %s217, 24
      %s219 = smul.addr %s218, 4
      %s220 = scalar_lea.vmem %s1, %s219
      %p221 = scmp.lt.s32.totalorder %s17, 1
      %s222 = scalar_select %p221, %s17, 1
      %s223 = smul.addr %s222, 6
      %s224 = smul.addr %s223, 8
      %s225 = scalar_lea.vmem %s5, %s224
      %s227 = sld [smem:[#allocation2]]
      %v228 = vld [vmem:[%s2] sm:$0xf]
      %v229 = vld [vmem:[%s2 + $0x4] sm:$0xf]
      %v230 = vld [vmem:[%s2 + $0x8] sm:$0xf]
      %v231 = vld [vmem:[%s2 + $0xc] sm:$0xf]
      %v232 = vld [vmem:[%s2 + $0x10] sm:$0xf]
      %v233 = vld [vmem:[%s2 + $0x14] sm:$0xf]
      %v234 = vld [vmem:[%s2 + $0x18] sm:$0xf]
      %v235 = vld [vmem:[%s2 + $0x1c] sm:$0xf]
      %v236 = vld [vmem:[%s2 + $0x20] sm:$0xf]
      %v237 = vld [vmem:[%s2 + $0x24] sm:$0xf]
      %v238 = vld [vmem:[%s2 + $0x28] sm:$0xf]
      %v239 = vld [vmem:[%s2 + $0x2c] sm:$0xf]
      %v240 = vld [vmem:[%s2 + $0x30] sm:$0xf]
      %v241 = vld [vmem:[%s2 + $0x34] sm:$0xf]
      %v242 = vld [vmem:[%s2 + $0x38] sm:$0xf]
      %v243 = vld [vmem:[%s2 + $0x3c] sm:$0xf]
      %v244 = vld [vmem:[%s2 + $0x40] sm:$0xf]
      %v245 = vld [vmem:[%s2 + $0x44] sm:$0xf]
      %v246 = vld [vmem:[%s2 + $0x48] sm:$0xf]
      %v247 = vld [vmem:[%s2 + $0x4c] sm:$0xf]
      %v248 = vld [vmem:[%s2 + $0x50] sm:$0xf]
      %v249 = vld [vmem:[%s2 + $0x54] sm:$0xf]
      %v250 = vld [vmem:[%s2 + $0x58] sm:$0xf]
      %v251 = vld [vmem:[%s2 + $0x5c] sm:$0xf]
      %v252 = vld [vmem:[%s2 + $0x60] sm:$0xf]
      %v253 = vld [vmem:[%s2 + $0x64] sm:$0xf]
      %v254 = vld [vmem:[%s2 + $0x68] sm:$0xf]
      %v255 = vld [vmem:[%s2 + $0x6c] sm:$0xf]
      %v256 = vld [vmem:[%s2 + $0x70] sm:$0xf]
      %v257 = vld [vmem:[%s2 + $0x74] sm:$0xf]
      %v258 = vld [vmem:[%s2 + $0x78] sm:$0xf]
      %v259 = vld [vmem:[%s2 + $0x7c] sm:$0xf]
      %v260 = vld [vmem:[%s2 + $0x80] sm:$0xf]
      %v261 = vld [vmem:[%s2 + $0x84] sm:$0xf]
      %v262 = vld [vmem:[%s2 + $0x88] sm:$0xf]
      %v263 = vld [vmem:[%s2 + $0x8c] sm:$0xf]
      %v264 = vld [vmem:[%s2 + $0x90] sm:$0xf]
      %v265 = vld [vmem:[%s2 + $0x94] sm:$0xf]
      %v266 = vld [vmem:[%s2 + $0x98] sm:$0xf]
      %v267 = vld [vmem:[%s2 + $0x9c] sm:$0xf]
      %v268 = vld [vmem:[%s2 + $0xa0] sm:$0xf]
      %v269 = vld [vmem:[%s2 + $0xa4] sm:$0xf]
      %v270 = vld [vmem:[%s2 + $0xa8] sm:$0xf]
      %v271 = vld [vmem:[%s2 + $0xac] sm:$0xf]
      %v272 = vld [vmem:[%s2 + $0xb0] sm:$0xf]
      %v273 = vld [vmem:[%s2 + $0xb4] sm:$0xf]
      %v274 = vld [vmem:[%s2 + $0xb8] sm:$0xf]
      %v275 = vld [vmem:[%s2 + $0xbc] sm:$0xf]
      %v276 = vld [vmem:[%s2 + $0xc0] sm:$0xf]
      %v277 = vld [vmem:[%s2 + $0xc4] sm:$0xf]
      %v278 = vld [vmem:[%s2 + $0xc8] sm:$0xf]
      %v279 = vld [vmem:[%s2 + $0xcc] sm:$0xf]
      %v280 = vld [vmem:[%s2 + $0xd0] sm:$0xf]
      %v281 = vld [vmem:[%s2 + $0xd4] sm:$0xf]
      %v282 = vld [vmem:[%s3] sm:$0x1]
      %v283 = vld [vmem:[%s4] sm:$0x1]
      %v284 = vld [vmem:[%s220] sm:$0xff]
      %v285 = vld [vmem:[%s220 + $0x8] sm:$0xff]
      %v286 = vld [vmem:[%s220 + $0x10] sm:$0xff]
      %v287 = vld [vmem:[%s220 + $0x18] sm:$0xff]
      %v288 = vld [vmem:[%s220 + $0x20] sm:$0xff]
      %v289 = vld [vmem:[%s220 + $0x28] sm:$0xff]
      %v290 = vld [vmem:[%s220 + $0x30] sm:$0xff]
      %v291 = vld [vmem:[%s220 + $0x38] sm:$0xff]
      %v292 = vld [vmem:[%s220 + $0x40] sm:$0xff]
      %v293 = vld [vmem:[%s220 + $0x48] sm:$0xff]
      %v294 = vld [vmem:[%s220 + $0x50] sm:$0xff]
      %v295 = vld [vmem:[%s220 + $0x58] sm:$0xff]
      %v308 = vunpack.c.l.b16 %v284
      %v309 = vunpack.c.h.b16 %v284
      %v310 = vunpack.c.l.b16 %v285
      %v311 = vunpack.c.h.b16 %v285
      %v312 = vunpack.c.l.b16 %v286
      %v313 = vunpack.c.h.b16 %v286
      %v314 = vunpack.c.l.b16 %v287
      %v315 = vunpack.c.h.b16 %v287
      %v316 = vunpack.c.l.b16 %v288
      %v317 = vunpack.c.h.b16 %v288
      %v318 = vunpack.c.l.b16 %v289
      %v319 = vunpack.c.h.b16 %v289
      %v320 = vunpack.c.l.b16 %v290
      %v321 = vunpack.c.h.b16 %v290
      %v322 = vunpack.c.l.b16 %v291
      %v323 = vunpack.c.h.b16 %v291
      %v324 = vunpack.c.l.b16 %v292
      %v325 = vunpack.c.h.b16 %v292
      %v326 = vunpack.c.l.b16 %v293
      %v327 = vunpack.c.h.b16 %v293
      %v328 = vunpack.c.l.b16 %v294
      %v329 = vunpack.c.h.b16 %v294
      %v330 = vunpack.c.l.b16 %v295
      %v331 = vunpack.c.h.b16 %v295
      %v332 = vpack.c.b16 %v312, %v308
      %v333 = vpack.c.b16 %v313, %v309
      %v334 = vpack.c.b16 %v314, %v310
      %v335 = vpack.c.b16 %v315, %v311
      %v336 = vpack.c.b16 %v320, %v316
      %v337 = vpack.c.b16 %v321, %v317
      %v338 = vpack.c.b16 %v322, %v318
      %v339 = vpack.c.b16 %v323, %v319
      %v340 = vpack.c.b16 %v328, %v324
      %v341 = vpack.c.b16 %v329, %v325
      %v342 = vpack.c.b16 %v330, %v326
      %v343 = vpack.c.b16 %v331, %v327
      %v407 = vunpack.c.l.b16 %v228
      %v408 = vunpack.c.l.b16 %v229
      %v409 = vunpack.c.l.b16 %v230
      %v410 = vunpack.c.l.b16 %v231
      %v411 = vunpack.c.l.b16 %v232
      %v412 = vunpack.c.l.b16 %v233
      %v413 = vunpack.c.l.b16 %v234
      %v414 = vunpack.c.l.b16 %v235
      %v415 = vunpack.c.l.b16 %v236
      %v416 = vunpack.c.l.b16 %v237
      %v417 = vunpack.c.l.b16 %v238
      %v418 = vunpack.c.l.b16 %v239
      %v419 = vunpack.c.l.b16 %v240
      %v420 = vunpack.c.l.b16 %v241
      %v421 = vunpack.c.l.b16 %v242
      %v422 = vunpack.c.l.b16 %v243
      %v423 = vunpack.c.l.b16 %v244
      %v424 = vunpack.c.l.b16 %v245
      %v425 = vunpack.c.l.b16 %v246
      %v426 = vunpack.c.l.b16 %v247
      %v427 = vunpack.c.l.b16 %v248
      %v428 = vunpack.c.l.b16 %v249
      %v429 = vunpack.c.l.b16 %v250
      %v430 = vunpack.c.l.b16 %v251
      %v431 = vunpack.c.l.b16 %v252
      %v432 = vunpack.c.l.b16 %v253
      %v433 = vunpack.c.l.b16 %v254
      %v434 = vunpack.c.l.b16 %v255
      %v435 = vunpack.c.l.b16 %v256
      %v436 = vunpack.c.l.b16 %v257
      %v437 = vunpack.c.l.b16 %v258
      %v438 = vunpack.c.l.b16 %v259
      %v439 = vunpack.c.l.b16 %v260
      %v440 = vunpack.c.l.b16 %v261
      %v441 = vunpack.c.l.b16 %v262
      %v442 = vunpack.c.l.b16 %v263
      %v443 = vunpack.c.l.b16 %v264
      %v444 = vunpack.c.l.b16 %v265
      %v445 = vunpack.c.l.b16 %v266
      %v446 = vunpack.c.l.b16 %v267
      %v447 = vunpack.c.l.b16 %v268
      %v448 = vunpack.c.l.b16 %v269
      %v449 = vunpack.c.l.b16 %v270
      %v450 = vunpack.c.l.b16 %v271
      %v451 = vunpack.c.l.b16 %v272
      %v452 = vunpack.c.l.b16 %v273
      %v453 = vunpack.c.l.b16 %v274
      %v454 = vunpack.c.l.b16 %v275
      %v455 = vunpack.c.l.b16 %v276
      %v456 = vunpack.c.l.b16 %v277
      %v457 = vunpack.c.l.b16 %v278
      %v458 = vunpack.c.l.b16 %v279
      %v459 = vunpack.c.l.b16 %v280
      %v460 = vunpack.c.l.b16 %v281
      %v461 = vpack.c.b16 %v408, %v407
      %v462 = vpack.c.b16 %v410, %v409
      %v463 = vpack.c.b16 %v412, %v411
      %v464 = vpack.c.b16 %v414, %v413
      %v465 = vpack.c.b16 %v416, %v415
      %v466 = vpack.c.b16 %v418, %v417
      %v467 = vpack.c.b16 %v420, %v419
      %v468 = vpack.c.b16 %v422, %v421
      %v469 = vpack.c.b16 %v424, %v423
      %v470 = vpack.c.b16 %v426, %v425
      %v471 = vpack.c.b16 %v428, %v427
      %v472 = vpack.c.b16 %v430, %v429
      %v473 = vpack.c.b16 %v432, %v431
      %v474 = vpack.c.b16 %v434, %v433
      %v475 = vpack.c.b16 %v436, %v435
      %v476 = vpack.c.b16 %v438, %v437
      %v477 = vpack.c.b16 %v440, %v439
      %v478 = vpack.c.b16 %v442, %v441
      %v479 = vpack.c.b16 %v444, %v443
      %v480 = vpack.c.b16 %v446, %v445
      %v481 = vpack.c.b16 %v448, %v447
      %v482 = vpack.c.b16 %v450, %v449
      %v483 = vpack.c.b16 %v452, %v451
      %v484 = vpack.c.b16 %v454, %v453
      %v485 = vpack.c.b16 %v456, %v455
      %v486 = vpack.c.b16 %v458, %v457
      %v487 = vpack.c.b16 %v460, %v459
      %vm515 = vcmask 392192
      %v517 = vsel %vm515, %v335, 0
      %v520 = vsel %vm515, %v339, 0
      %v523 = vsel %vm515, %v343, 0
      %525 = vmatpush.bf16.msra.mxu0 %v468
      %526 = vmatpush.bf16.msra.mxu0 %v467
      %527 = vmatpush.bf16.msra.mxu0 %v466
      %528 = vmatpush.bf16.msra.mxu0 %v465
      %529 = vmatpush.bf16.msra.mxu0 %v464
      %530 = vmatpush.bf16.msra.mxu0 %v463
      %531 = vmatpush.bf16.msra.mxu0 %v462
      %532 = vmatpush.bf16.msra.mxu0 %v461
      %533 = vmatmul.bf16.gmra.mxu0 %v332
      %v534 = vpop.f32.mrf.mxu0
      %v535 = vadd.f32 0.0, %v534
      %v536 = vpop.f32.mrf.mxu0
      %v537 = vadd.f32 0.0, %v536
      %538 = vmatmul.bf16.gmra.mxu0 %v336
      %v539 = vpop.f32.mrf.mxu0
      %v540 = vadd.f32 0.0, %v539
      %v541 = vpop.f32.mrf.mxu0
      %v542 = vadd.f32 0.0, %v541
      %543 = vmatmul.bf16.gmra.mxu0 %v340
      %v544 = vpop.f32.mrf.mxu0
      %v545 = vadd.f32 0.0, %v544
      %v546 = vpop.f32.mrf.mxu0
      %v547 = vadd.f32 0.0, %v546
      %548 = vdwg.mxu0
      %549 = vmatpush.bf16.msra.mxu0 %v476
      %550 = vmatpush.bf16.msra.mxu0 %v475
      %551 = vmatpush.bf16.msra.mxu0 %v474
      %552 = vmatpush.bf16.msra.mxu0 %v473
      %553 = vmatpush.bf16.msra.mxu0 %v472
      %554 = vmatpush.bf16.msra.mxu0 %v471
      %555 = vmatpush.bf16.msra.mxu0 %v470
      %556 = vmatpush.bf16.msra.mxu0 %v469
      %557 = vmatmul.bf16.gmra.mxu0 %v333
      %v558 = vpop.f32.mrf.mxu0
      %v559 = vadd.f32 %v535, %v558
      %v560 = vpop.f32.mrf.mxu0
      %v561 = vadd.f32 %v537, %v560
      %562 = vmatmul.bf16.gmra.mxu0 %v337
      %v563 = vpop.f32.mrf.mxu0
      %v564 = vadd.f32 %v540, %v563
      %v565 = vpop.f32.mrf.mxu0
      %v566 = vadd.f32 %v542, %v565
      %567 = vmatmul.bf16.gmra.mxu0 %v341
      %v568 = vpop.f32.mrf.mxu0
      %v569 = vadd.f32 %v545, %v568
      %v570 = vpop.f32.mrf.mxu0
      %v571 = vadd.f32 %v547, %v570
      %572 = vdwg.mxu0
      %573 = vmatpush.bf16.msra.mxu0 %v484
      %574 = vmatpush.bf16.msra.mxu0 %v483
      %575 = vmatpush.bf16.msra.mxu0 %v482
      %576 = vmatpush.bf16.msra.mxu0 %v481
      %577 = vmatpush.bf16.msra.mxu0 %v480
      %578 = vmatpush.bf16.msra.mxu0 %v479
      %579 = vmatpush.bf16.msra.mxu0 %v478
      %580 = vmatpush.bf16.msra.mxu0 %v477
      %581 = vmatmul.bf16.gmra.mxu0 %v334
      %v582 = vpop.f32.mrf.mxu0
      %v583 = vadd.f32 %v559, %v582
      %v584 = vpop.f32.mrf.mxu0
      %v585 = vadd.f32 %v561, %v584
      %586 = vmatmul.bf16.gmra.mxu0 %v338
      %v587 = vpop.f32.mrf.mxu0
      %v588 = vadd.f32 %v564, %v587
      %v589 = vpop.f32.mrf.mxu0
      %v590 = vadd.f32 %v566, %v589
      %591 = vmatmul.bf16.gmra.mxu0 %v342
      %v592 = vpop.f32.mrf.mxu0
      %v593 = vadd.f32 %v569, %v592
      %v594 = vpop.f32.mrf.mxu0
      %v595 = vadd.f32 %v571, %v594
      %596 = vdwg.mxu0
      %597 = vmatpush.bf16.msra.mxu0 0
      %598 = vmatpush.bf16.msra.mxu0 0
      %599 = vmatpush.bf16.msra.mxu0 0
      %600 = vmatpush.bf16.msra.mxu0 0
      %601 = vmatpush.bf16.msra.mxu0 0
      %602 = vmatpush.bf16.msra.mxu0 %v487
      %603 = vmatpush.bf16.msra.mxu0 %v486
      %604 = vmatpush.bf16.msra.mxu0 %v485
      %605 = vmatmul.bf16.gmra.mxu0 %v517
      %v606 = vpop.f32.mrf.mxu0
      %v607 = vadd.f32 %v583, %v606
      %v608 = vpop.f32.mrf.mxu0
      %v609 = vadd.f32 %v585, %v608
      %610 = vmatmul.bf16.gmra.mxu0 %v520
      %v611 = vpop.f32.mrf.mxu0
      %v612 = vadd.f32 %v588, %v611
      %v613 = vpop.f32.mrf.mxu0
      %v614 = vadd.f32 %v590, %v613
      %615 = vmatmul.bf16.gmra.mxu0 %v523
      %v616 = vpop.f32.mrf.mxu0
      %v617 = vadd.f32 %v593, %v616
      %v618 = vpop.f32.mrf.mxu0
      %v619 = vadd.f32 %v595, %v618
      %620 = vdwg.mxu0
      %v622 = vperm.slane %v282, 0
      %v624 = vmul.f32 %v607, %v622
      %v625 = vmul.f32 %v609, %v622
      %v626 = vmul.f32 %v612, %v622
      %v627 = vmul.f32 %v614, %v622
      %v628 = vmul.f32 %v617, %v622
      %v629 = vmul.f32 %v619, %v622
      %v631 = vperm.slane %v283, 0
      %v633 = vadd.f32 %v624, %v631
      %v634 = vadd.f32 %v625, %v631
      %v635 = vadd.f32 %v626, %v631
      %v636 = vadd.f32 %v627, %v631
      %v637 = vadd.f32 %v628, %v631
      %v638 = vadd.f32 %v629, %v631
      %s639 = smul.f32 %s227, 0.5
      %v640 = vstv %s639
      %v641 = vadd.f32 %v640, 0.0
      %v642 = vadd.f32 %v641, %v633
      %v643 = vadd.f32 %v641, %v634
      %v644 = vstv %s227
      %vm645 = vcmp.ge.f32.partialorder %v642, %v644
      %vm646 = vcmp.ge.f32.partialorder %v643, %v644
      %v647 = vsub.f32 %v642, %v644
      %v648 = vsub.f32 %v643, %v644
      %v649 = vsel %vm645, %v647, %v642
      %v650 = vsel %vm646, %v648, %v643
      %v651 = vsel %vm645, 1, 0
      %v652 = vsel %vm646, 1, 0
      %v653 = vcvt.s32.f32 %v651
      %v654 = vcvt.s32.f32 %v652
      %v655 = vadd.f32 %v653, 0.0
      %v656 = vadd.f32 %v654, 0.0
      %vm657 = vcmp.le.f32.partialorder %v649, -0.001
      %vm658 = vcmp.le.f32.partialorder %v650, -0.001
      %vm659 = vcmp.gt.f32.partialorder %v655, 0.0
      %vm660 = vcmp.gt.f32.partialorder %v656, 0.0
      %vm661 = vmand %vm657, %vm659
      %vm662 = vmand %vm658, %vm660
      %v663 = vadd.f32 %v649, %v644
      %v664 = vadd.f32 %v650, %v644
      %v665 = vsel %vm661, %v663, %v649
      %v666 = vsel %vm662, %v664, %v650
      %v667 = vsel %vm661, 1, 0
      %v668 = vsel %vm662, 1, 0
      %v669 = vcvt.s32.f32 %v667
      %v670 = vcvt.s32.f32 %v668
      %v671 = vsub.f32 %v655, %v669
      %v672 = vsub.f32 %v656, %v670
      %v673 = vsub.f32 %v653, %v669
      %v674 = vsub.f32 %v654, %v670
      %v675 = vmul.f32 %v673, %v644
      %v676 = vmul.f32 %v674, %v644
      %677 = vst [vmem:[%s225] sm:$0xff] %v675
      %678 = vst [vmem:[%s225 + $0x8] sm:$0xff] %v676
      %v679 = vadd.f32 %v665, %v635
      %v680 = vadd.f32 %v666, %v636
      %vm681 = vcmp.ge.f32.partialorder %v679, %v644
      %vm682 = vcmp.ge.f32.partialorder %v680, %v644
      %v683 = vsub.f32 %v679, %v644
      %v684 = vsub.f32 %v680, %v644
      %v685 = vsel %vm681, %v683, %v679
      %v686 = vsel %vm682, %v684, %v680
      %v687 = vsel %vm681, 1, 0
      %v688 = vsel %vm682, 1, 0
      %v689 = vcvt.s32.f32 %v687
      %v690 = vcvt.s32.f32 %v688
      %v691 = vadd.f32 %v671, %v689
      %v692 = vadd.f32 %v672, %v690
      %vm693 = vcmp.le.f32.partialorder %v685, -0.001
      %vm694 = vcmp.le.f32.partialorder %v686, -0.001
      %vm695 = vcmp.gt.f32.partialorder %v691, 0.0
      %vm696 = vcmp.gt.f32.partialorder %v692, 0.0
      %vm697 = vmand %vm693, %vm695
      %vm698 = vmand %vm694, %vm696
      %v699 = vadd.f32 %v685, %v644
      %v700 = vadd.f32 %v686, %v644
      %v701 = vsel %vm697, %v699, %v685
      %v702 = vsel %vm698, %v700, %v686
      %v703 = vsel %vm697, 1, 0
      %v704 = vsel %vm698, 1, 0
      %v705 = vcvt.s32.f32 %v703
      %v706 = vcvt.s32.f32 %v704
      %v707 = vsub.f32 %v691, %v705
      %v708 = vsub.f32 %v692, %v706
      %v709 = vsub.f32 %v689, %v705
      %v710 = vsub.f32 %v690, %v706
      %v711 = vmul.f32 %v709, %v644
      %v712 = vmul.f32 %v710, %v644
      %s713 = scalar_lea.vmem %s225, 16
      %714 = vst [vmem:[%s713] sm:$0xff] %v711
      %715 = vst [vmem:[%s713 + $0x8] sm:$0xff] %v712
      %v716 = vadd.f32 %v701, %v637
      %v717 = vadd.f32 %v702, %v638
      %vm718 = vcmp.ge.f32.partialorder %v716, %v644
      %vm719 = vcmp.ge.f32.partialorder %v717, %v644
      %v720 = vsub.f32 %v716, %v644
      %v721 = vsub.f32 %v717, %v644
      %v722 = vsel %vm718, %v720, %v716
      %v723 = vsel %vm719, %v721, %v717
      %v724 = vsel %vm718, 1, 0
      %v725 = vsel %vm719, 1, 0
      %v726 = vcvt.s32.f32 %v724
      %v727 = vcvt.s32.f32 %v725
      %v728 = vadd.f32 %v707, %v726
      %v729 = vadd.f32 %v708, %v727
      %vm730 = vcmp.le.f32.partialorder %v722, -0.001
      %vm731 = vcmp.le.f32.partialorder %v723, -0.001
      %vm732 = vcmp.gt.f32.partialorder %v728, 0.0
      %vm733 = vcmp.gt.f32.partialorder %v729, 0.0
      %vm734 = vmand %vm730, %vm732
      %vm735 = vmand %vm731, %vm733
      %v736 = vsel %vm734, 1, 0
      %v737 = vsel %vm735, 1, 0
      %v738 = vcvt.s32.f32 %v736
      %v739 = vcvt.s32.f32 %v737
      %v740 = vsub.f32 %v726, %v738
      %v741 = vsub.f32 %v727, %v739
      %v742 = vmul.f32 %v740, %v644
      %v743 = vmul.f32 %v741, %v644
      %s744 = scalar_lea.vmem %s225, 32
      %745 = vst [vmem:[%s744] sm:$0xff] %v742
      %746 = vst [vmem:[%s744 + $0x8] sm:$0xff] %v743
      %p747 = scmp.lt.s32.totalorder %s17, 1
      %s748 = scalar_select %p747, %s17, 1
      %s749 = smul.addr %s748, 6
      %s750 = smul.addr %s749, 8
      %s751 = scalar_lea.vmem %s5, %s750
      // Predicated region
      $region41: #{spiking_basic_block_forward.2} parent=39 // pred_check
        %p752 = pneg %p145
      $region42: #{spiking_basic_block_forward.2} parent=39 // pred_check_branch
        %754 = sbr.rel (%p752) target = $region44
      $region43: #{spiking_basic_block_forward.2} parent=39 // pred_region
        _
      $region44: #{spiking_basic_block_forward.2} parent=39 // pred_fallthru
        _
    $region40: #{spiking_basic_block_forward.2} parent=5 // pred_fallthru
      _
    %p755 = scmp.le.s32.totalorder 2, %s12
    // Predicated region
    $region45: #{spiking_basic_block_forward.2} parent=5 // pred_check
      %p756 = pneg %p755
    $region46: #{spiking_basic_block_forward.2} parent=5 // pred_check_branch
      %758 = sbr.rel (%p756) target = $region48
    $region47: #{spiking_basic_block_forward.2} parent=5 // pred_region
      %s759 = ssub.s32 %s12, 2
      // Predicated region
      $region49: #{spiking_basic_block_forward.2} parent=47 // pred_check
        %p760 = pneg %p151
      $region50: #{spiking_basic_block_forward.2} parent=47 // pred_check_branch
        %762 = sbr.rel (%p760) target = $region52
      $region51: #{spiking_basic_block_forward.2} parent=47 // pred_region
        %p763 = scmp.lt.s32.totalorder %s18, 1
        %s764 = scalar_select %p763, %s18, 1
        %s765 = smul.addr %s764, 6
        %s766 = smul.addr %s765, 8
        %s767 = scalar_lea.vmem %s5, %s766
      $region52: #{spiking_basic_block_forward.2} parent=47 // pred_fallthru
        _
    $region48: #{spiking_basic_block_forward.2} parent=5 // pred_fallthru
      _
  $region6: #{spiking_basic_block_forward.2} parent=0 // loop_footer
    %s16 = sadd.s32 1, %s12
  $region7: #{spiking_basic_block_forward.2} parent=0 // loop_footer_branch
    %11 = sbr.rel target = $region3
  $region8: #{spiking_basic_block_forward.2} parent=0 // loop_exit
    _

// kernel: spiking_basic_block_forward.3
$region0: #{spiking_basic_block_forward.3}
  #allocation0 [shape = 'u32[]', space=smem, size = 0x4, offset = 0x4, fixed_abs, tag = 'smem constant byte address 0x4 - core index']
  #allocation1 [shape = 'u32[72,128]{1,0:T(1,128)}', space=vmem, size = 0x9000, scoped, tag = 'internal scratch']
  #allocation2 [shape = 'f32[1]{0:T(128)S(6)}', space=smem, size = 0x200, scoped, tag = 'scoped memory for spiking_basic_block_forward.3']
  %s0 = inlined_call_operand.<no memory space> [shape: f32[1], index: 0, kind: input, shape index: {}]
  %s1 = inlined_call_operand.vmem [shape: bf16[2,48,432], index: 1, kind: input, shape index: {}]
  %s2 = inlined_call_operand.vmem [shape: bf16[432,128], index: 2, kind: input, shape index: {}]
  %s3 = inlined_call_operand.vmem [shape: f32[1,128], index: 3, kind: input, shape index: {}]
  %s4 = inlined_call_operand.vmem [shape: f32[1,128], index: 4, kind: input, shape index: {}]
  %s5 = inlined_call_operand.vmem [shape: f32[2,3,16,128], index: 5, kind: input, shape index: {}]
  %s6 = inlined_call_operand.vmem [shape: f32[2,3,16,128], index: 6, kind: output, shape index: {}]
  %s7 = sld [smem:[#allocation0]]
  $region57: #{spiking_basic_block_forward.3} parent=0
    _
  %s9 = ssub.s32 1, %s7
  %s10 = scalar_select 0, %s9, %s7
  %11 = sst [smem:[#allocation2]] %s0
  loop: start=0, step=1, limit=4
  $region2: #{spiking_basic_block_forward.3} parent=0 // loop_pre_header
    _
  $region3: #{spiking_basic_block_forward.3} parent=0 // loop_header
    %s13 = sphi 0, %s17
    %p14 = scmp.ge.s32.totalorder %s13, 4
    %s21 = sphi 0, %s21
    %s23 = sphi 0, %s21
    %s24 = sphi 0, %s23
    %s38 = sphi 0, %s24
    %s44 = sphi 0, %s46
    %s47 = sphi 0, %s44
    %s48 = sphi 0, %s47
    %s64 = sphi 0, %s48
    %s68 = sphi 0, %s68
    %s70 = sphi 0, %s68
    %s71 = sphi 0, %s70
    %s85 = sphi 0, %s71
    %s89 = sphi 0, %s89
    %s91 = sphi 0, %s89
    %s92 = sphi 0, %s91
    %s106 = sphi 0, %s92
    %s110 = sphi 0, %s110
    %s112 = sphi 0, %s110
    %s113 = sphi 0, %s112
    %s127 = sphi 0, %s113
    %s133 = sphi 0, %s135
    %s136 = sphi 0, %s133
    %s137 = sphi 0, %s136
    %s153 = sphi 0, %s137
    %s159 = sphi 0, %s161
    %s162 = sphi 0, %s159
    %s163 = sphi 0, %s162
    %s179 = sphi 0, %s163
  $region4: #{spiking_basic_block_forward.3} parent=0 // loop_header_branch
    %16 = sbr.rel (%p14) target = $region8
  $region5: #{spiking_basic_block_forward.3} parent=0 // loop_body
    %s18 = ssub.s32 %s13, 1
    %s19 = ssub.s32 %s13, 2
    %s20 = sadd.s32 %s13, 1
    %s22 = sadd.s32 %s21, 1
    %p25 = scmp.eq.s32.totalorder %s13, 1
    %p26 = scmp.ne.s32.totalorder %s21, %s23
    %p27 = scmp.eq.s32.totalorder %s13, 0
    %p28 = por %p26, %p27
    %p29 = scmp.ne.s32.totalorder %s21, %s23
    %p30 = scmp.eq.s32.totalorder %s18, 1
    %p31 = por %p29, %p30
    %p32 = scmp.ne.s32.totalorder %s23, %s24
    %p33 = scmp.eq.s32.totalorder %s18, 0
    %p34 = por %p32, %p33
    %p35 = scmp.ne.s32.totalorder %s23, %s24
    %p36 = scmp.eq.s32.totalorder %s19, 1
    %p37 = por %p35, %p36
    %p39 = scmp.ne.s32.totalorder %s24, %s38
    %p40 = scmp.eq.s32.totalorder %s19, 0
    %p41 = por %p39, %p40
    %s42 = ssub.s32 %s13, %s20
    %p43 = scmp.eq.s32.totalorder %s42, 0
    %s45 = sadd.s32 %s44, 1
    %s46 = scalar_select %p43, %s44, %s45
    %p49 = pneg %p43
    %p50 = scmp.eq.s32.totalorder %s13, 1
    %p51 = por %p49, %p50
    %p52 = scmp.ne.s32.totalorder %s44, %s47
    %p53 = scmp.eq.s32.totalorder %s13, 0
    %p54 = por %p52, %p53
    %p55 = scmp.ne.s32.totalorder %s44, %s47
    %p56 = scmp.eq.s32.totalorder %s18, 1
    %p57 = por %p55, %p56
    %p58 = scmp.ne.s32.totalorder %s47, %s48
    %p59 = scmp.eq.s32.totalorder %s18, 0
    %p60 = por %p58, %p59
    %p61 = scmp.ne.s32.totalorder %s47, %s48
    %p62 = scmp.eq.s32.totalorder %s19, 1
    %p63 = por %p61, %p62
    %p65 = scmp.ne.s32.totalorder %s48, %s64
    %p66 = scmp.eq.s32.totalorder %s19, 0
    %p67 = por %p65, %p66
    %s69 = sadd.s32 %s68, 1
    %p72 = scmp.eq.s32.totalorder %s13, 1
    %p73 = scmp.ne.s32.totalorder %s68, %s70
    %p74 = scmp.eq.s32.totalorder %s13, 0
    %p75 = por %p73, %p74
    %p76 = scmp.ne.s32.totalorder %s68, %s70
    %p77 = scmp.eq.s32.totalorder %s18, 1
    %p78 = por %p76, %p77
    %p79 = scmp.ne.s32.totalorder %s70, %s71
    %p80 = scmp.eq.s32.totalorder %s18, 0
    %p81 = por %p79, %p80
    %p82 = scmp.ne.s32.totalorder %s70, %s71
    %p83 = scmp.eq.s32.totalorder %s19, 1
    %p84 = por %p82, %p83
    %p86 = scmp.ne.s32.totalorder %s71, %s85
    %p87 = scmp.eq.s32.totalorder %s19, 0
    %p88 = por %p86, %p87
    %s90 = sadd.s32 %s89, 1
    %p93 = scmp.eq.s32.totalorder %s13, 1
    %p94 = scmp.ne.s32.totalorder %s89, %s91
    %p95 = scmp.eq.s32.totalorder %s13, 0
    %p96 = por %p94, %p95
    %p97 = scmp.ne.s32.totalorder %s89, %s91
    %p98 = scmp.eq.s32.totalorder %s18, 1
    %p99 = por %p97, %p98
    %p100 = scmp.ne.s32.totalorder %s91, %s92
    %p101 = scmp.eq.s32.totalorder %s18, 0
    %p102 = por %p100, %p101
    %p103 = scmp.ne.s32.totalorder %s91, %s92
    %p104 = scmp.eq.s32.totalorder %s19, 1
    %p105 = por %p103, %p104
    %p107 = scmp.ne.s32.totalorder %s92, %s106
    %p108 = scmp.eq.s32.totalorder %s19, 0
    %p109 = por %p107, %p108
    %s111 = sadd.s32 %s110, 1
    %p114 = scmp.eq.s32.totalorder %s13, 1
    %p115 = scmp.ne.s32.totalorder %s110, %s112
    %p116 = scmp.eq.s32.totalorder %s13, 0
    %p117 = por %p115, %p116
    %p118 = scmp.ne.s32.totalorder %s110, %s112
    %p119 = scmp.eq.s32.totalorder %s18, 1
    %p120 = por %p118, %p119
    %p121 = scmp.ne.s32.totalorder %s112, %s113
    %p122 = scmp.eq.s32.totalorder %s18, 0
    %p123 = por %p121, %p122
    %p124 = scmp.ne.s32.totalorder %s112, %s113
    %p125 = scmp.eq.s32.totalorder %s19, 1
    %p126 = por %p124, %p125
    %p128 = scmp.ne.s32.totalorder %s113, %s127
    %p129 = scmp.eq.s32.totalorder %s19, 0
    %p130 = por %p128, %p129
    %s131 = ssub.s32 %s13, %s20
    %p132 = scmp.eq.s32.totalorder %s131, 0
    %s134 = sadd.s32 %s133, 1
    %s135 = scalar_select %p132, %s133, %s134
    %p138 = pneg %p132
    %p139 = scmp.eq.s32.totalorder %s13, 1
    %p140 = por %p138, %p139
    %p141 = scmp.ne.s32.totalorder %s133, %s136
    %p142 = scmp.eq.s32.totalorder %s13, 0
    %p143 = por %p141, %p142
    %p144 = scmp.ne.s32.totalorder %s133, %s136
    %p145 = scmp.eq.s32.totalorder %s18, 1
    %p146 = por %p144, %p145
    %p147 = scmp.ne.s32.totalorder %s136, %s137
    %p148 = scmp.eq.s32.totalorder %s18, 0
    %p149 = por %p147, %p148
    %p150 = scmp.ne.s32.totalorder %s136, %s137
    %p151 = scmp.eq.s32.totalorder %s19, 1
    %p152 = por %p150, %p151
    %p154 = scmp.ne.s32.totalorder %s137, %s153
    %p155 = scmp.eq.s32.totalorder %s19, 0
    %p156 = por %p154, %p155
    %s157 = ssub.s32 %s13, %s20
    %p158 = scmp.eq.s32.totalorder %s157, 0
    %s160 = sadd.s32 %s159, 1
    %s161 = scalar_select %p158, %s159, %s160
    %p164 = pneg %p158
    %p165 = scmp.eq.s32.totalorder %s13, 1
    %p166 = por %p164, %p165
    %p167 = scmp.ne.s32.totalorder %s159, %s162
    %p168 = scmp.eq.s32.totalorder %s13, 0
    %p169 = por %p167, %p168
    %p170 = scmp.ne.s32.totalorder %s159, %s162
    %p171 = scmp.eq.s32.totalorder %s18, 1
    %p172 = por %p170, %p171
    %p173 = scmp.ne.s32.totalorder %s162, %s163
    %p174 = scmp.eq.s32.totalorder %s18, 0
    %p175 = por %p173, %p174
    %p176 = scmp.ne.s32.totalorder %s162, %s163
    %p177 = scmp.eq.s32.totalorder %s19, 1
    %p178 = por %p176, %p177
    %p180 = scmp.ne.s32.totalorder %s163, %s179
    %p181 = scmp.eq.s32.totalorder %s19, 0
    %p182 = por %p180, %p181
    %p183 = scmp.le.s32.totalorder 1, %s13
    %p184 = scmp.lt.s32.totalorder %s13, 3
    %p185 = pnand %p183, %p184
    %p186 = pneg %p185
    // Predicated region
    $region9: #{spiking_basic_block_forward.3} parent=5 // pred_check
      _
    $region10: #{spiking_basic_block_forward.3} parent=5 // pred_check_branch
      %188 = sbr.rel (%p185) target = $region12
    $region11: #{spiking_basic_block_forward.3} parent=5 // pred_region
      %s189 = ssub.s32 %s13, 1
      // Predicated region
      $region13: #{spiking_basic_block_forward.3} parent=11 // pred_check
        %p190 = pneg %p34
      $region14: #{spiking_basic_block_forward.3} parent=11 // pred_check_branch
        %192 = sbr.rel (%p190) target = $region16
      $region15: #{spiking_basic_block_forward.3} parent=11 // pred_region
        _
      $region16: #{spiking_basic_block_forward.3} parent=11 // pred_fallthru
        _
      // Predicated region
      $region17: #{spiking_basic_block_forward.3} parent=11 // pred_check
        %p193 = pneg %p81
      $region18: #{spiking_basic_block_forward.3} parent=11 // pred_check_branch
        %195 = sbr.rel (%p193) target = $region20
      $region19: #{spiking_basic_block_forward.3} parent=11 // pred_region
        _
      $region20: #{spiking_basic_block_forward.3} parent=11 // pred_fallthru
        _
      // Predicated region
      $region21: #{spiking_basic_block_forward.3} parent=11 // pred_check
        %p196 = pneg %p102
      $region22: #{spiking_basic_block_forward.3} parent=11 // pred_check_branch
        %198 = sbr.rel (%p196) target = $region24
      $region23: #{spiking_basic_block_forward.3} parent=11 // pred_region
        _
      $region24: #{spiking_basic_block_forward.3} parent=11 // pred_fallthru
        _
      // Predicated region
      $region25: #{spiking_basic_block_forward.3} parent=11 // pred_check
        %p199 = pneg %p123
      $region26: #{spiking_basic_block_forward.3} parent=11 // pred_check_branch
        %201 = sbr.rel (%p199) target = $region28
      $region27: #{spiking_basic_block_forward.3} parent=11 // pred_region
        _
      $region28: #{spiking_basic_block_forward.3} parent=11 // pred_fallthru
        _
    $region12: #{spiking_basic_block_forward.3} parent=5 // pred_fallthru
      _
    %p202 = scmp.lt.s32.totalorder %s13, 2
    // Predicated region
    $region29: #{spiking_basic_block_forward.3} parent=5 // pred_check
      %p203 = pneg %p202
    $region30: #{spiking_basic_block_forward.3} parent=5 // pred_check_branch
      %205 = sbr.rel (%p203) target = $region32
    $region31: #{spiking_basic_block_forward.3} parent=5 // pred_region
      // Predicated region
      $region33: #{spiking_basic_block_forward.3} parent=31 // pred_check
        %p206 = pneg %p54
      $region34: #{spiking_basic_block_forward.3} parent=31 // pred_check_branch
        %208 = sbr.rel (%p206) target = $region36
      $region35: #{spiking_basic_block_forward.3} parent=31 // pred_region
        %p209 = scmp.lt.s32.totalorder %s13, 1
        %s210 = scalar_select %p209, %s13, 1
        %s211 = smul.addr %s210, 24
        %s212 = smul.addr %s211, 4
        %s213 = scalar_lea.vmem %s1, %s212
      $region36: #{spiking_basic_block_forward.3} parent=31 // pred_fallthru
        _
      // Predicated region
      $region37: #{spiking_basic_block_forward.3} parent=31 // pred_check
        %p214 = pneg %p143
      $region38: #{spiking_basic_block_forward.3} parent=31 // pred_check_branch
        %216 = sbr.rel (%p214) target = $region40
      $region39: #{spiking_basic_block_forward.3} parent=31 // pred_region
        %p217 = scmp.lt.s32.totalorder %s13, 1
        %s218 = scalar_select %p217, %s13, 1
        %s219 = smul.addr %s218, 6
        %s220 = smul.addr %s219, 8
        %s221 = scalar_lea.vmem %s5, %s220
      $region40: #{spiking_basic_block_forward.3} parent=31 // pred_fallthru
        _
    $region32: #{spiking_basic_block_forward.3} parent=5 // pred_fallthru
      _
    %p222 = scmp.le.s32.totalorder 1, %s13
    %p223 = scmp.lt.s32.totalorder %s13, 3
    %p224 = pnand %p222, %p223
    %p225 = pneg %p224
    // Predicated region
    $region41: #{spiking_basic_block_forward.3} parent=5 // pred_check
      _
    $region42: #{spiking_basic_block_forward.3} parent=5 // pred_check_branch
      %227 = sbr.rel (%p224) target = $region44
    $region43: #{spiking_basic_block_forward.3} parent=5 // pred_region
      %s228 = ssub.s32 %s13, 1
      %p229 = pneg %p34
      %p230 = pneg %p31
      %p231 = scmp.lt.s32.totalorder %s18, 1
      %s232 = scalar_select %p231, %s18, 1
      %s233 = smul.addr %s232, 24
      %s234 = smul.addr %s233, 4
      %s235 = scalar_lea.vmem %s1, %s234
      %p236 = pneg %p60
      %p237 = pneg %p57
      %p238 = pneg %p81
      %p239 = pneg %p78
      %p240 = pneg %p102
      %p241 = pneg %p99
      %p242 = pneg %p123
      %p243 = pneg %p120
      %p244 = scmp.lt.s32.totalorder %s18, 1
      %s245 = scalar_select %p244, %s18, 1
      %s246 = smul.addr %s245, 6
      %s247 = smul.addr %s246, 8
      %s248 = scalar_lea.vmem %s5, %s247
      %p249 = pneg %p149
      %p250 = pneg %p146
      %p251 = pneg %p175
      %p252 = pneg %p172
      %p253 = scmp.lt.s32.totalorder %s18, 1
      %s254 = scalar_select %p253, %s18, 1
      %s255 = smul.addr %s254, 6
      %s256 = smul.addr %s255, 8
      %s257 = scalar_lea.vmem %s6, %s256
      %p258 = scmp.lt.s32.totalorder %s18, 1
      %s259 = scalar_select %p258, %s18, 1
      %s260 = smul.addr %s259, 24
      %s261 = smul.addr %s260, 4
      %s262 = scalar_lea.vmem %s1, %s261
      %p263 = scmp.lt.s32.totalorder %s18, 1
      %s264 = scalar_select %p263, %s18, 1
      %s265 = smul.addr %s264, 6
      %s266 = smul.addr %s265, 8
      %s267 = scalar_lea.vmem %s5, %s266
      %p268 = scmp.lt.s32.totalorder %s18, 1
      %s269 = scalar_select %p268, %s18, 1
      %s270 = smul.addr %s269, 6
      %s271 = smul.addr %s270, 8
      %s272 = scalar_lea.vmem %s6, %s271
      %s274 = sld [smem:[#allocation2]]
      %v275 = vld [vmem:[%s2] sm:$0xf]
      %v276 = vld [vmem:[%s2 + $0x4] sm:$0xf]
      %v277 = vld [vmem:[%s2 + $0x8] sm:$0xf]
      %v278 = vld [vmem:[%s2 + $0xc] sm:$0xf]
      %v279 = vld [vmem:[%s2 + $0x10] sm:$0xf]
      %v280 = vld [vmem:[%s2 + $0x14] sm:$0xf]
      %v281 = vld [vmem:[%s2 + $0x18] sm:$0xf]
      %v282 = vld [vmem:[%s2 + $0x1c] sm:$0xf]
      %v283 = vld [vmem:[%s2 + $0x20] sm:$0xf]
      %v284 = vld [vmem:[%s2 + $0x24] sm:$0xf]
      %v285 = vld [vmem:[%s2 + $0x28] sm:$0xf]
      %v286 = vld [vmem:[%s2 + $0x2c] sm:$0xf]
      %v287 = vld [vmem:[%s2 + $0x30] sm:$0xf]
      %v288 = vld [vmem:[%s2 + $0x34] sm:$0xf]
      %v289 = vld [vmem:[%s2 + $0x38] sm:$0xf]
      %v290 = vld [vmem:[%s2 + $0x3c] sm:$0xf]
      %v291 = vld [vmem:[%s2 + $0x40] sm:$0xf]
      %v292 = vld [vmem:[%s2 + $0x44] sm:$0xf]
      %v293 = vld [vmem:[%s2 + $0x48] sm:$0xf]
      %v294 = vld [vmem:[%s2 + $0x4c] sm:$0xf]
      %v295 = vld [vmem:[%s2 + $0x50] sm:$0xf]
      %v296 = vld [vmem:[%s2 + $0x54] sm:$0xf]
      %v297 = vld [vmem:[%s2 + $0x58] sm:$0xf]
      %v298 = vld [vmem:[%s2 + $0x5c] sm:$0xf]
      %v299 = vld [vmem:[%s2 + $0x60] sm:$0xf]
      %v300 = vld [vmem:[%s2 + $0x64] sm:$0xf]
      %v301 = vld [vmem:[%s2 + $0x68] sm:$0xf]
      %v302 = vld [vmem:[%s2 + $0x6c] sm:$0xf]
      %v303 = vld [vmem:[%s2 + $0x70] sm:$0xf]
      %v304 = vld [vmem:[%s2 + $0x74] sm:$0xf]
      %v305 = vld [vmem:[%s2 + $0x78] sm:$0xf]
      %v306 = vld [vmem:[%s2 + $0x7c] sm:$0xf]
      %v307 = vld [vmem:[%s2 + $0x80] sm:$0xf]
      %v308 = vld [vmem:[%s2 + $0x84] sm:$0xf]
      %v309 = vld [vmem:[%s2 + $0x88] sm:$0xf]
      %v310 = vld [vmem:[%s2 + $0x8c] sm:$0xf]
      %v311 = vld [vmem:[%s2 + $0x90] sm:$0xf]
      %v312 = vld [vmem:[%s2 + $0x94] sm:$0xf]
      %v313 = vld [vmem:[%s2 + $0x98] sm:$0xf]
      %v314 = vld [vmem:[%s2 + $0x9c] sm:$0xf]
      %v315 = vld [vmem:[%s2 + $0xa0] sm:$0xf]
      %v316 = vld [vmem:[%s2 + $0xa4] sm:$0xf]
      %v317 = vld [vmem:[%s2 + $0xa8] sm:$0xf]
      %v318 = vld [vmem:[%s2 + $0xac] sm:$0xf]
      %v319 = vld [vmem:[%s2 + $0xb0] sm:$0xf]
      %v320 = vld [vmem:[%s2 + $0xb4] sm:$0xf]
      %v321 = vld [vmem:[%s2 + $0xb8] sm:$0xf]
      %v322 = vld [vmem:[%s2 + $0xbc] sm:$0xf]
      %v323 = vld [vmem:[%s2 + $0xc0] sm:$0xf]
      %v324 = vld [vmem:[%s2 + $0xc4] sm:$0xf]
      %v325 = vld [vmem:[%s2 + $0xc8] sm:$0xf]
      %v326 = vld [vmem:[%s2 + $0xcc] sm:$0xf]
      %v327 = vld [vmem:[%s2 + $0xd0] sm:$0xf]
      %v328 = vld [vmem:[%s2 + $0xd4] sm:$0xf]
      %v329 = vld [vmem:[%s3] sm:$0x1]
      %v330 = vld [vmem:[%s4] sm:$0x1]
      %v331 = vld [vmem:[%s262] sm:$0xff]
      %v332 = vld [vmem:[%s262 + $0x8] sm:$0xff]
      %v333 = vld [vmem:[%s262 + $0x10] sm:$0xff]
      %v334 = vld [vmem:[%s262 + $0x18] sm:$0xff]
      %v335 = vld [vmem:[%s262 + $0x20] sm:$0xff]
      %v336 = vld [vmem:[%s262 + $0x28] sm:$0xff]
      %v337 = vld [vmem:[%s262 + $0x30] sm:$0xff]
      %v338 = vld [vmem:[%s262 + $0x38] sm:$0xff]
      %v339 = vld [vmem:[%s262 + $0x40] sm:$0xff]
      %v340 = vld [vmem:[%s262 + $0x48] sm:$0xff]
      %v341 = vld [vmem:[%s262 + $0x50] sm:$0xff]
      %v342 = vld [vmem:[%s262 + $0x58] sm:$0xff]
      %v355 = vunpack.c.l.b16 %v331
      %v356 = vunpack.c.h.b16 %v331
      %v357 = vunpack.c.l.b16 %v332
      %v358 = vunpack.c.h.b16 %v332
      %v359 = vunpack.c.l.b16 %v333
      %v360 = vunpack.c.h.b16 %v333
      %v361 = vunpack.c.l.b16 %v334
      %v362 = vunpack.c.h.b16 %v334
      %v363 = vunpack.c.l.b16 %v335
      %v364 = vunpack.c.h.b16 %v335
      %v365 = vunpack.c.l.b16 %v336
      %v366 = vunpack.c.h.b16 %v336
      %v367 = vunpack.c.l.b16 %v337
      %v368 = vunpack.c.h.b16 %v337
      %v369 = vunpack.c.l.b16 %v338
      %v370 = vunpack.c.h.b16 %v338
      %v371 = vunpack.c.l.b16 %v339
      %v372 = vunpack.c.h.b16 %v339
      %v373 = vunpack.c.l.b16 %v340
      %v374 = vunpack.c.h.b16 %v340
      %v375 = vunpack.c.l.b16 %v341
      %v376 = vunpack.c.h.b16 %v341
      %v377 = vunpack.c.l.b16 %v342
      %v378 = vunpack.c.h.b16 %v342
      %v379 = vpack.c.b16 %v359, %v355
      %v380 = vpack.c.b16 %v360, %v356
      %v381 = vpack.c.b16 %v361, %v357
      %v382 = vpack.c.b16 %v362, %v358
      %v383 = vpack.c.b16 %v367, %v363
      %v384 = vpack.c.b16 %v368, %v364
      %v385 = vpack.c.b16 %v369, %v365
      %v386 = vpack.c.b16 %v370, %v366
      %v387 = vpack.c.b16 %v375, %v371
      %v388 = vpack.c.b16 %v376, %v372
      %v389 = vpack.c.b16 %v377, %v373
      %v390 = vpack.c.b16 %v378, %v374
      %v454 = vunpack.c.l.b16 %v275
      %v455 = vunpack.c.l.b16 %v276
      %v456 = vunpack.c.l.b16 %v277
      %v457 = vunpack.c.l.b16 %v278
      %v458 = vunpack.c.l.b16 %v279
      %v459 = vunpack.c.l.b16 %v280
      %v460 = vunpack.c.l.b16 %v281
      %v461 = vunpack.c.l.b16 %v282
      %v462 = vunpack.c.l.b16 %v283
      %v463 = vunpack.c.l.b16 %v284
      %v464 = vunpack.c.l.b16 %v285
      %v465 = vunpack.c.l.b16 %v286
      %v466 = vunpack.c.l.b16 %v287
      %v467 = vunpack.c.l.b16 %v288
      %v468 = vunpack.c.l.b16 %v289
      %v469 = vunpack.c.l.b16 %v290
      %v470 = vunpack.c.l.b16 %v291
      %v471 = vunpack.c.l.b16 %v292
      %v472 = vunpack.c.l.b16 %v293
      %v473 = vunpack.c.l.b16 %v294
      %v474 = vunpack.c.l.b16 %v295
      %v475 = vunpack.c.l.b16 %v296
      %v476 = vunpack.c.l.b16 %v297
      %v477 = vunpack.c.l.b16 %v298
      %v478 = vunpack.c.l.b16 %v299
      %v479 = vunpack.c.l.b16 %v300
      %v480 = vunpack.c.l.b16 %v301
      %v481 = vunpack.c.l.b16 %v302
      %v482 = vunpack.c.l.b16 %v303
      %v483 = vunpack.c.l.b16 %v304
      %v484 = vunpack.c.l.b16 %v305
      %v485 = vunpack.c.l.b16 %v306
      %v486 = vunpack.c.l.b16 %v307
      %v487 = vunpack.c.l.b16 %v308
      %v488 = vunpack.c.l.b16 %v309
      %v489 = vunpack.c.l.b16 %v310
      %v490 = vunpack.c.l.b16 %v311
      %v491 = vunpack.c.l.b16 %v312
      %v492 = vunpack.c.l.b16 %v313
      %v493 = vunpack.c.l.b16 %v314
      %v494 = vunpack.c.l.b16 %v315
      %v495 = vunpack.c.l.b16 %v316
      %v496 = vunpack.c.l.b16 %v317
      %v497 = vunpack.c.l.b16 %v318
      %v498 = vunpack.c.l.b16 %v319
      %v499 = vunpack.c.l.b16 %v320
      %v500 = vunpack.c.l.b16 %v321
      %v501 = vunpack.c.l.b16 %v322
      %v502 = vunpack.c.l.b16 %v323
      %v503 = vunpack.c.l.b16 %v324
      %v504 = vunpack.c.l.b16 %v325
      %v505 = vunpack.c.l.b16 %v326
      %v506 = vunpack.c.l.b16 %v327
      %v507 = vunpack.c.l.b16 %v328
      %v508 = vpack.c.b16 %v455, %v454
      %v509 = vpack.c.b16 %v457, %v456
      %v510 = vpack.c.b16 %v459, %v458
      %v511 = vpack.c.b16 %v461, %v460
      %v512 = vpack.c.b16 %v463, %v462
      %v513 = vpack.c.b16 %v465, %v464
      %v514 = vpack.c.b16 %v467, %v466
      %v515 = vpack.c.b16 %v469, %v468
      %v516 = vpack.c.b16 %v471, %v470
      %v517 = vpack.c.b16 %v473, %v472
      %v518 = vpack.c.b16 %v475, %v474
      %v519 = vpack.c.b16 %v477, %v476
      %v520 = vpack.c.b16 %v479, %v478
      %v521 = vpack.c.b16 %v481, %v480
      %v522 = vpack.c.b16 %v483, %v482
      %v523 = vpack.c.b16 %v485, %v484
      %v524 = vpack.c.b16 %v487, %v486
      %v525 = vpack.c.b16 %v489, %v488
      %v526 = vpack.c.b16 %v491, %v490
      %v527 = vpack.c.b16 %v493, %v492
      %v528 = vpack.c.b16 %v495, %v494
      %v529 = vpack.c.b16 %v497, %v496
      %v530 = vpack.c.b16 %v499, %v498
      %v531 = vpack.c.b16 %v501, %v500
      %v532 = vpack.c.b16 %v503, %v502
      %v533 = vpack.c.b16 %v505, %v504
      %v534 = vpack.c.b16 %v507, %v506
      %vm562 = vcmask 392192
      %v564 = vsel %vm562, %v382, 0
      %v567 = vsel %vm562, %v386, 0
      %v570 = vsel %vm562, %v390, 0
      %572 = vmatpush.bf16.msra.mxu0 %v515
      %573 = vmatpush.bf16.msra.mxu0 %v514
      %574 = vmatpush.bf16.msra.mxu0 %v513
      %575 = vmatpush.bf16.msra.mxu0 %v512
      %576 = vmatpush.bf16.msra.mxu0 %v511
      %577 = vmatpush.bf16.msra.mxu0 %v510
      %578 = vmatpush.bf16.msra.mxu0 %v509
      %579 = vmatpush.bf16.msra.mxu0 %v508
      %580 = vmatmul.bf16.gmra.mxu0 %v379
      %v581 = vpop.f32.mrf.mxu0
      %v582 = vadd.f32 0.0, %v581
      %v583 = vpop.f32.mrf.mxu0
      %v584 = vadd.f32 0.0, %v583
      %585 = vmatmul.bf16.gmra.mxu0 %v383
      %v586 = vpop.f32.mrf.mxu0
      %v587 = vadd.f32 0.0, %v586
      %v588 = vpop.f32.mrf.mxu0
      %v589 = vadd.f32 0.0, %v588
      %590 = vmatmul.bf16.gmra.mxu0 %v387
      %v591 = vpop.f32.mrf.mxu0
      %v592 = vadd.f32 0.0, %v591
      %v593 = vpop.f32.mrf.mxu0
      %v594 = vadd.f32 0.0, %v593
      %595 = vdwg.mxu0
      %596 = vmatpush.bf16.msra.mxu0 %v523
      %597 = vmatpush.bf16.msra.mxu0 %v522
      %598 = vmatpush.bf16.msra.mxu0 %v521
      %599 = vmatpush.bf16.msra.mxu0 %v520
      %600 = vmatpush.bf16.msra.mxu0 %v519
      %601 = vmatpush.bf16.msra.mxu0 %v518
      %602 = vmatpush.bf16.msra.mxu0 %v517
      %603 = vmatpush.bf16.msra.mxu0 %v516
      %604 = vmatmul.bf16.gmra.mxu0 %v380
      %v605 = vpop.f32.mrf.mxu0
      %v606 = vadd.f32 %v582, %v605
      %v607 = vpop.f32.mrf.mxu0
      %v608 = vadd.f32 %v584, %v607
      %609 = vmatmul.bf16.gmra.mxu0 %v384
      %v610 = vpop.f32.mrf.mxu0
      %v611 = vadd.f32 %v587, %v610
      %v612 = vpop.f32.mrf.mxu0
      %v613 = vadd.f32 %v589, %v612
      %614 = vmatmul.bf16.gmra.mxu0 %v388
      %v615 = vpop.f32.mrf.mxu0
      %v616 = vadd.f32 %v592, %v615
      %v617 = vpop.f32.mrf.mxu0
      %v618 = vadd.f32 %v594, %v617
      %619 = vdwg.mxu0
      %620 = vmatpush.bf16.msra.mxu0 %v531
      %621 = vmatpush.bf16.msra.mxu0 %v530
      %622 = vmatpush.bf16.msra.mxu0 %v529
      %623 = vmatpush.bf16.msra.mxu0 %v528
      %624 = vmatpush.bf16.msra.mxu0 %v527
      %625 = vmatpush.bf16.msra.mxu0 %v526
      %626 = vmatpush.bf16.msra.mxu0 %v525
      %627 = vmatpush.bf16.msra.mxu0 %v524
      %628 = vmatmul.bf16.gmra.mxu0 %v381
      %v629 = vpop.f32.mrf.mxu0
      %v630 = vadd.f32 %v606, %v629
      %v631 = vpop.f32.mrf.mxu0
      %v632 = vadd.f32 %v608, %v631
      %633 = vmatmul.bf16.gmra.mxu0 %v385
      %v634 = vpop.f32.mrf.mxu0
      %v635 = vadd.f32 %v611, %v634
      %v636 = vpop.f32.mrf.mxu0
      %v637 = vadd.f32 %v613, %v636
      %638 = vmatmul.bf16.gmra.mxu0 %v389
      %v639 = vpop.f32.mrf.mxu0
      %v640 = vadd.f32 %v616, %v639
      %v641 = vpop.f32.mrf.mxu0
      %v642 = vadd.f32 %v618, %v641
      %643 = vdwg.mxu0
      %644 = vmatpush.bf16.msra.mxu0 0
      %645 = vmatpush.bf16.msra.mxu0 0
      %646 = vmatpush.bf16.msra.mxu0 0
      %647 = vmatpush.bf16.msra.mxu0 0
      %648 = vmatpush.bf16.msra.mxu0 0
      %649 = vmatpush.bf16.msra.mxu0 %v534
      %650 = vmatpush.bf16.msra.mxu0 %v533
      %651 = vmatpush.bf16.msra.mxu0 %v532
      %652 = vmatmul.bf16.gmra.mxu0 %v564
      %v653 = vpop.f32.mrf.mxu0
      %v654 = vadd.f32 %v630, %v653
      %v655 = vpop.f32.mrf.mxu0
      %v656 = vadd.f32 %v632, %v655
      %657 = vmatmul.bf16.gmra.mxu0 %v567
      %v658 = vpop.f32.mrf.mxu0
      %v659 = vadd.f32 %v635, %v658
      %v660 = vpop.f32.mrf.mxu0
      %v661 = vadd.f32 %v637, %v660
      %662 = vmatmul.bf16.gmra.mxu0 %v570
      %v663 = vpop.f32.mrf.mxu0
      %v664 = vadd.f32 %v640, %v663
      %v665 = vpop.f32.mrf.mxu0
      %v666 = vadd.f32 %v642, %v665
      %667 = vdwg.mxu0
      %v669 = vperm.slane %v329, 0
      %v671 = vmul.f32 %v654, %v669
      %v672 = vmul.f32 %v656, %v669
      %v673 = vmul.f32 %v659, %v669
      %v674 = vmul.f32 %v661, %v669
      %v675 = vmul.f32 %v664, %v669
      %v676 = vmul.f32 %v666, %v669
      %v678 = vperm.slane %v330, 0
      %v680 = vadd.f32 %v671, %v678
      %v681 = vadd.f32 %v672, %v678
      %v682 = vadd.f32 %v673, %v678
      %v683 = vadd.f32 %v674, %v678
      %v684 = vadd.f32 %v675, %v678
      %v685 = vadd.f32 %v676, %v678
      %s686 = smul.f32 %s274, 0.5
      %v687 = vstv %s686
      %v688 = vadd.f32 %v687, 0.0
      %v689 = vld [vmem:[%s267] sm:$0xff]
      %v690 = vld [vmem:[%s267 + $0x8] sm:$0xff]
      %v691 = vadd.f32 %v680, %v689
      %v692 = vadd.f32 %v681, %v690
      %v693 = vadd.f32 %v688, %v691
      %v694 = vadd.f32 %v688, %v692
      %v695 = vstv %s274
      %vm696 = vcmp.ge.f32.partialorder %v693, %v695
      %vm697 = vcmp.ge.f32.partialorder %v694, %v695
      %v698 = vsub.f32 %v693, %v695
      %v699 = vsub.f32 %v694, %v695
      %v700 = vsel %vm696, %v698, %v693
      %v701 = vsel %vm697, %v699, %v694
      %v702 = vsel %vm696, 1, 0
      %v703 = vsel %vm697, 1, 0
      %v704 = vcvt.s32.f32 %v702
      %v705 = vcvt.s32.f32 %v703
      %v706 = vadd.f32 %v704, 0.0
      %v707 = vadd.f32 %v705, 0.0
      %vm708 = vcmp.le.f32.partialorder %v700, -0.001
      %vm709 = vcmp.le.f32.partialorder %v701, -0.001
      %vm710 = vcmp.gt.f32.partialorder %v706, 0.0
      %vm711 = vcmp.gt.f32.partialorder %v707, 0.0
      %vm712 = vmand %vm708, %vm710
      %vm713 = vmand %vm709, %vm711
      %v714 = vadd.f32 %v700, %v695
      %v715 = vadd.f32 %v701, %v695
      %v716 = vsel %vm712, %v714, %v700
      %v717 = vsel %vm713, %v715, %v701
      %v718 = vsel %vm712, 1, 0
      %v719 = vsel %vm713, 1, 0
      %v720 = vcvt.s32.f32 %v718
      %v721 = vcvt.s32.f32 %v719
      %v722 = vsub.f32 %v706, %v720
      %v723 = vsub.f32 %v707, %v721
      %v724 = vsub.f32 %v704, %v720
      %v725 = vsub.f32 %v705, %v721
      %v726 = vmul.f32 %v724, %v695
      %v727 = vmul.f32 %v725, %v695
      %728 = vst [vmem:[%s272] sm:$0xff] %v726
      %729 = vst [vmem:[%s272 + $0x8] sm:$0xff] %v727
      %s730 = scalar_lea.vmem %s267, 16
      %v731 = vld [vmem:[%s730] sm:$0xff]
      %v732 = vld [vmem:[%s730 + $0x8] sm:$0xff]
      %v733 = vadd.f32 %v682, %v731
      %v734 = vadd.f32 %v683, %v732
      %v735 = vadd.f32 %v716, %v733
      %v736 = vadd.f32 %v717, %v734
      %vm737 = vcmp.ge.f32.partialorder %v735, %v695
      %vm738 = vcmp.ge.f32.partialorder %v736, %v695
      %v739 = vsub.f32 %v735, %v695
      %v740 = vsub.f32 %v736, %v695
      %v741 = vsel %vm737, %v739, %v735
      %v742 = vsel %vm738, %v740, %v736
      %v743 = vsel %vm737, 1, 0
      %v744 = vsel %vm738, 1, 0
      %v745 = vcvt.s32.f32 %v743
      %v746 = vcvt.s32.f32 %v744
      %v747 = vadd.f32 %v722, %v745
      %v748 = vadd.f32 %v723, %v746
      %vm749 = vcmp.le.f32.partialorder %v741, -0.001
      %vm750 = vcmp.le.f32.partialorder %v742, -0.001
      %vm751 = vcmp.gt.f32.partialorder %v747, 0.0
      %vm752 = vcmp.gt.f32.partialorder %v748, 0.0
      %vm753 = vmand %vm749, %vm751
      %vm754 = vmand %vm750, %vm752
      %v755 = vadd.f32 %v741, %v695
      %v756 = vadd.f32 %v742, %v695
      %v757 = vsel %vm753, %v755, %v741
      %v758 = vsel %vm754, %v756, %v742
      %v759 = vsel %vm753, 1, 0
      %v760 = vsel %vm754, 1, 0
      %v761 = vcvt.s32.f32 %v759
      %v762 = vcvt.s32.f32 %v760
      %v763 = vsub.f32 %v747, %v761
      %v764 = vsub.f32 %v748, %v762
      %v765 = vsub.f32 %v745, %v761
      %v766 = vsub.f32 %v746, %v762
      %v767 = vmul.f32 %v765, %v695
      %v768 = vmul.f32 %v766, %v695
      %s769 = scalar_lea.vmem %s272, 16
      %770 = vst [vmem:[%s769] sm:$0xff] %v767
      %771 = vst [vmem:[%s769 + $0x8] sm:$0xff] %v768
      %s772 = scalar_lea.vmem %s267, 32
      %v773 = vld [vmem:[%s772] sm:$0xff]
      %v774 = vld [vmem:[%s772 + $0x8] sm:$0xff]
      %v775 = vadd.f32 %v684, %v773
      %v776 = vadd.f32 %v685, %v774
      %v777 = vadd.f32 %v757, %v775
      %v778 = vadd.f32 %v758, %v776
      %vm779 = vcmp.ge.f32.partialorder %v777, %v695
      %vm780 = vcmp.ge.f32.partialorder %v778, %v695
      %v781 = vsub.f32 %v777, %v695
      %v782 = vsub.f32 %v778, %v695
      %v783 = vsel %vm779, %v781, %v777
      %v784 = vsel %vm780, %v782, %v778
      %v785 = vsel %vm779, 1, 0
      %v786 = vsel %vm780, 1, 0
      %v787 = vcvt.s32.f32 %v785
      %v788 = vcvt.s32.f32 %v786
      %v789 = vadd.f32 %v763, %v787
      %v790 = vadd.f32 %v764, %v788
      %vm791 = vcmp.le.f32.partialorder %v783, -0.001
      %vm792 = vcmp.le.f32.partialorder %v784, -0.001
      %vm793 = vcmp.gt.f32.partialorder %v789, 0.0
      %vm794 = vcmp.gt.f32.partialorder %v790, 0.0
      %vm795 = vmand %vm791, %vm793
      %vm796 = vmand %vm792, %vm794
      %v797 = vsel %vm795, 1, 0
      %v798 = vsel %vm796, 1, 0
      %v799 = vcvt.s32.f32 %v797
      %v800 = vcvt.s32.f32 %v798
      %v801 = vsub.f32 %v787, %v799
      %v802 = vsub.f32 %v788, %v800
      %v803 = vmul.f32 %v801, %v695
      %v804 = vmul.f32 %v802, %v695
      %s805 = scalar_lea.vmem %s272, 32
      %806 = vst [vmem:[%s805] sm:$0xff] %v803
      %807 = vst [vmem:[%s805 + $0x8] sm:$0xff] %v804
      %p808 = scmp.lt.s32.totalorder %s18, 1
      %s809 = scalar_select %p808, %s18, 1
      %s810 = smul.addr %s809, 6
      %s811 = smul.addr %s810, 8
      %s812 = scalar_lea.vmem %s6, %s811
      // Predicated region
      $region45: #{spiking_basic_block_forward.3} parent=43 // pred_check
        %p813 = pneg %p172
      $region46: #{spiking_basic_block_forward.3} parent=43 // pred_check_branch
        %815 = sbr.rel (%p813) target = $region48
      $region47: #{spiking_basic_block_forward.3} parent=43 // pred_region
        _
      $region48: #{spiking_basic_block_forward.3} parent=43 // pred_fallthru
        _
    $region44: #{spiking_basic_block_forward.3} parent=5 // pred_fallthru
      _
    %p816 = scmp.le.s32.totalorder 2, %s13
    // Predicated region
    $region49: #{spiking_basic_block_forward.3} parent=5 // pred_check
      %p817 = pneg %p816
    $region50: #{spiking_basic_block_forward.3} parent=5 // pred_check_branch
      %819 = sbr.rel (%p817) target = $region52
    $region51: #{spiking_basic_block_forward.3} parent=5 // pred_region
      %s820 = ssub.s32 %s13, 2
      // Predicated region
      $region53: #{spiking_basic_block_forward.3} parent=51 // pred_check
        %p821 = pneg %p178
      $region54: #{spiking_basic_block_forward.3} parent=51 // pred_check_branch
        %823 = sbr.rel (%p821) target = $region56
      $region55: #{spiking_basic_block_forward.3} parent=51 // pred_region
        %p824 = scmp.lt.s32.totalorder %s19, 1
        %s825 = scalar_select %p824, %s19, 1
        %s826 = smul.addr %s825, 6
        %s827 = smul.addr %s826, 8
        %s828 = scalar_lea.vmem %s6, %s827
      $region56: #{spiking_basic_block_forward.3} parent=51 // pred_fallthru
        _
    $region52: #{spiking_basic_block_forward.3} parent=5 // pred_fallthru
      _
  $region6: #{spiking_basic_block_forward.3} parent=0 // loop_footer
    %s17 = sadd.s32 1, %s13
  $region7: #{spiking_basic_block_forward.3} parent=0 // loop_footer_branch
    %12 = sbr.rel target = $region3
  $region8: #{spiking_basic_block_forward.3} parent=0 // loop_exit
    _

</llo_original>
